<compile_context>
chip_gen: v6e
topology: v6e:2x2x1
jax: 0.10.0
libtpu: 0.0.40
codegen_flags: <defaults>
</compile_context>

<pallas_src>
import functools
import math

import jax
import jax.numpy as jnp
from jax import lax
from jax.experimental import pallas as pl
from jax.experimental.pallas import tpu as pltpu


def _pick_tile(n, cap):
    """Largest multiple of 128 <= cap that divides n (n is a multiple of 128)."""
    if n <= cap:
        return n
    best = 128
    d = 256
    while d <= cap:
        if n % d == 0:
            best = d
        d += 128
    return best


def _flash_attn_kernel(q_ref, k_ref, v_ref, o_ref, kt_ref, vb_ref, *,
                       scale, tk, nk, t_real, needs_mask):
    """One grid step = one (batch, head, q-tile); kv loop lives inside.

    q_ref: (C, tq); k_ref / v_ref: (C, Tp); o_ref: (C, tq).
    kt_ref: (nk, tk, C) bf16 scratch (K^T per kv tile, staged at qi == 0).
    vb_ref: (nk, C, tk) bf16 scratch (V per kv tile, staged at qi == 0).
    """
    qi = pl.program_id(2)
    ch, tq = q_ref.shape

    # ---- once per (batch, head): stage K^T / V as bf16 in VMEM -------------
    # Static python loop + static slices: no dynamic minor-dim indexing, and
    # the (C, tk) -> (tk, C) transposes run once per head, not per kv step.
    @pl.when(qi == 0)
    def _():
        for j in range(nk):
            ks = k_ref[:, j * tk:(j + 1) * tk]                      # (C, tk)
            kt_ref[j] = jnp.transpose(ks).astype(jnp.bfloat16)      # (tk, C)
            vb_ref[j] = v_ref[:, j * tk:(j + 1) * tk].astype(jnp.bfloat16)

    # Fold the full softmax scale (ch**-0.5 == (ch**-0.25)^2) onto q once per
    # q tile, outside the kv loop; bf16 operand -> native MXU path.
    qb = (q_ref[...].astype(jnp.float32) * scale).astype(jnp.bfloat16)  # (C,tq)

    def kv_step(j, carry, mask_tail):
        m_prev, l_prev, acc_prev = carry
        kt = kt_ref[j]                                   # (tk, C) bf16
        vb = vb_ref[j]                                   # (C, tk) bf16
        # s[u, t] = sum_c k[c, u] * q[c, t]  -- natural MXU form, no transpose.
        s = lax.dot_general(kt, qb, (((1,), (0,)), ((), ())),
                            preferred_element_type=jnp.float32)     # (tk, tq)
        if mask_tail:
            key_idx = j * tk + lax.broadcasted_iota(jnp.int32, s.shape, 0)
            s = jnp.where(key_idx < t_real, s, -1e30)
        # Online softmax state is lane-dense: m, l are (1, tq), acc is (C, tq).
        m_new = jnp.maximum(m_prev, jnp.max(s, axis=0, keepdims=True))
        alpha = jnp.exp(m_prev - m_new)                              # (1, tq)
        p = jnp.exp(s - m_new)                                       # (tk, tq) f32
        l_new = alpha * l_prev + jnp.sum(p, axis=0, keepdims=True)
        # acc[c, t] += sum_u v[c, u] * p[u, t]  -- natural MXU form again.
        pv = lax.dot_general(vb, p.astype(jnp.bfloat16),
                             (((1,), (0,)), ((), ())),
                             preferred_element_type=jnp.float32)     # (C, tq)
        acc_new = alpha * acc_prev + pv
        return m_new, l_new, acc_new

    m0 = jnp.full((1, tq), -1e30, dtype=jnp.float32)
    l0 = jnp.zeros((1, tq), dtype=jnp.float32)
    a0 = jnp.zeros((ch, tq), dtype=jnp.float32)
    carry = (m0, l0, a0)

    # Padding (< 128 <= tk) can only touch the LAST kv tile, so every tile is
    # guaranteed >= 1 real key (finite row max) and the masked step can be
    # peeled off; the hot loop runs mask-free.
    n_plain = nk - 1 if needs_mask else nk
    if n_plain > 0:
        carry = lax.fori_loop(0, n_plain,
                              lambda j, c: kv_step(j, c, False),
                              carry, unroll=(n_plain <= 8))
    if needs_mask:
        carry = kv_step(nk - 1, carry, True)
    _, l, acc = carry

    # Exact divide: runs once per q tile, negligible cost, best parity with
    # the f32 torch softmax.
    o_ref[...] = (acc / l).astype(o_ref.dtype)


def attention_pallas(qkv, n_heads):
    """Forward pass of Attention(n_heads) on qkv of shape (B, 3*H*C, *spatial)."""
    assert qkv.ndim >= 3, qkv.ndim
    assert qkv.shape[1] % (3 * n_heads) == 0
    B = qkv.shape[0]
    spatial = qkv.shape[2:]
    T = math.prod(spatial)
    width = qkv.shape[1]
    H = n_heads
    ch = width // (3 * H)
    scale = float(ch) ** (-0.5)

    x = qkv.reshape(B, width, T)

    # Lane-dense T: pad to a multiple of 128 (padded keys masked in-kernel on
    # the last kv tile only; padded query columns sliced off below).
    Tp = ((T + 127) // 128) * 128
    if Tp != T:
        x = jnp.pad(x, ((0, 0), (0, 0), (0, Tp - T)))

    # Free reshape: (B, 3*H*C, Tp) -> (B, 3H, C, Tp).  Q/K/V of head h live at
    # rows h, H+h, 2H+h of axis 1 -- selected purely via index_maps, so no
    # q/k/v copies are ever materialized in HBM.
    x = x.reshape(B, 3 * H, ch, Tp)

    tq = _pick_tile(Tp, 512)   # q tile (grid axis)
    tk = _pick_tile(Tp, 256)   # kv slice (in-kernel loop); 256 keeps the f32
                               # score tile at <= 512 KiB (v5e vst-friendly).
    nq = Tp // tq
    nk = Tp // tk
    needs_mask = Tp != T
    # Invariant required by the -1e30 mask / m-init: every kv tile holds at
    # least one real (unpadded) key.
    assert Tp - T < 128 <= tk, (T, Tp, tk)

    kernel = functools.partial(_flash_attn_kernel, scale=scale, tk=tk, nk=nk,
                               t_real=T, needs_mask=needs_mask)

    # K/V block index is constant across the innermost qi axis -> DMA'd once
    # per (b, h) and kept resident in VMEM.
    q_spec = pl.BlockSpec((None, None, ch, tq), lambda b, h, qi: (b, h, 0, qi))
    k_spec = pl.BlockSpec((None, None, ch, Tp), lambda b, h, qi: (b, H + h, 0, 0))
    v_spec = pl.BlockSpec((None, None, ch, Tp), lambda b, h, qi: (b, 2 * H + h, 0, 0))
    o_spec = pl.BlockSpec((None, None, ch, tq), lambda b, h, qi: (b, h, 0, qi))

    itemsize = jnp.dtype(qkv.dtype).itemsize
    cost = pl.CostEstimate(
        flops=4 * B * H * T * T * ch,
        transcendentals=B * H * T * T,
        bytes_accessed=(3 * B * H * ch * T + B * H * ch * T) * itemsize,
    )

    # Rough VMEM budget (double-buffered inputs/output + bf16 K^T/V scratch +
    # live f32 score tile).  Keep the scoped limit explicit so large-T configs
    # stay within v7x's smaller VMEM (64 MiB physical / 32 MiB default).
    vmem_est = (2 * ch * tq * itemsize           # q (double buffered)
                + 2 * 2 * ch * Tp * itemsize     # k, v (double buffered)
                + 2 * ch * tq * itemsize         # out
                + nk * tk * 128 * 2              # K^T scratch (lane padded)
                + ch * Tp * 2                    # V bf16 scratch
                + 2 * tk * tq * 4)               # live f32 score / p tile
    vmem_limit = int(min(max(2 * vmem_est, 32 * 1024 * 1024), 48 * 1024 * 1024))

    out = pl.pallas_call(
        kernel,
        out_shape=jax.ShapeDtypeStruct((B, H, ch, Tp), qkv.dtype),
        grid_spec=pltpu.PrefetchScalarGridSpec(
            num_scalar_prefetch=0,
            grid=(B, H, nq),
            in_specs=[q_spec, k_spec, v_spec],
            out_specs=o_spec,
            scratch_shapes=[
                pltpu.VMEM((nk, tk, ch), jnp.bfloat16),   # K^T per kv tile
                pltpu.VMEM((nk, ch, tk), jnp.bfloat16),   # V   per kv tile
            ],
        ),
        compiler_params=pltpu.CompilerParams(
            dimension_semantics=("parallel", "parallel", "arbitrary"),
            vmem_limit_bytes=vmem_limit),
        cost_estimate=cost,
    )(x, x, x)   # same array three times -> no q/k/v split copies in HBM

    if Tp != T:
        out = out[..., :T]
    return out.reshape(B, H * ch, *spatial)


def attention_reference(qkv, n_heads):
    """Pure-JAX reference mirroring the PyTorch code (f32 matmuls + softmax)."""
    B = qkv.shape[0]
    spatial = qkv.shape[2:]
    x = qkv.reshape(B, qkv.shape[1], -1)
    width, T = x.shape[1], x.shape[2]
    ch = width // (3 * n_heads)
    q, k, v = jnp.split(x, 3, axis=1)
    scale = float(ch) ** (-0.25)
    q = (q * scale).reshape(B * n_heads, ch, T)
    k = (k * scale).reshape(B * n_heads, ch, T)
    v = v.reshape(B * n_heads, ch, T)
    w = jnp.einsum('bct,bcs->bts', q, k)
    w = jax.nn.softmax(w.astype(jnp.float32), axis=-1).astype(w.dtype)
    out = jnp.einsum('bts,bcs->bct', w, v)
    return out.reshape(B, n_heads * ch, *spatial)


if __name__ == "__main__":
    key = jax.random.PRNGKey(0)
    B, n_heads, ch = 2, 2, 32                  # qkv channels = 3*H*C = 192
    k1, k2 = jax.random.split(key)

    # Tolerance note: the kernel runs both matmuls with bf16 operands (f32
    # accumulate, f32 softmax), so allow ~2e-2 vs the f32 reference.
    TOL = dict(atol=2e-2, rtol=2e-2)

    # Case 1: spatial 16x16 -> T = 256 (lane-dense, no padding path).
    qkv1 = jax.random.normal(k1, (B, 3 * n_heads * ch, 16, 16), dtype=jnp.float32)
    out1 = jax.block_until_ready(attention_pallas(qkv1, n_heads))
    ref1 = attention_reference(qkv1, n_heads)
    assert out1.shape == ref1.shape, (out1.shape, ref1.shape)
    assert jnp.allclose(out1, ref1, **TOL), float(jnp.max(jnp.abs(out1 - ref1)))

    # Case 2: spatial 4x4 -> T = 16 (exercises pad-to-128 + masked tail tile).
    qkv2 = jax.random.normal(k2, (B, 3 * n_heads * ch, 4, 4), dtype=jnp.float32)
    out2 = jax.block_until_ready(attention_pallas(qkv2, n_heads))
    ref2 = attention_reference(qkv2, n_heads)
    assert out2.shape == ref2.shape, (out2.shape, ref2.shape)
    assert jnp.allclose(out2, ref2, **TOL), float(jnp.max(jnp.abs(out2 - ref2)))

    print("KERNEL_OK")
</pallas_src>

<mosaic_0001>
module attributes {stable_mosaic.version = 11 : i64} {
  func.func @_flash_attn_kernel(%arg0: i32, %arg1: i32, %arg2: i32, %arg3: memref<1x1x32x256xf32, #tpu.memory_space<vmem>>, %arg4: memref<1x1x32x256xf32, #tpu.memory_space<vmem>>, %arg5: memref<1x1x32x256xf32, #tpu.memory_space<vmem>>, %arg6: memref<1x1x32x256xf32, #tpu.memory_space<vmem>>, %arg7: memref<1x256x32xbf16, #tpu.memory_space<vmem>>, %arg8: memref<1x32x256xbf16, #tpu.memory_space<vmem>>) attributes {dimension_semantics = [#tpu.dimension_semantics<parallel>, #tpu.dimension_semantics<parallel>, #tpu.dimension_semantics<arbitrary>], iteration_bounds = array<i64: 2, 2, 1>, scalar_prefetch = 0 : i64, scratch_operands = 2 : i64, tpu.core_type = #tpu.core_type<tc>, window_params = [{transform_indices = @transform_0, window_bounds = array<i64: 1, 1, 32, 256>}, {transform_indices = @transform_1, window_bounds = array<i64: 1, 1, 32, 256>}, {transform_indices = @transform_2, window_bounds = array<i64: 1, 1, 32, 256>}, {transform_indices = @transform_3, window_bounds = array<i64: 1, 1, 32, 256>}]} {
    %c0_i32 = arith.constant 0 : i32
    %0 = arith.cmpi eq, %arg2, %c0_i32 : i32
    %1 = arith.extui %0 : i1 to i32
    %c0_i32_0 = arith.constant 0 : i32
    %2 = arith.cmpi ne, %1, %c0_i32_0 : i32
    scf.if %2 {
      %c0_20 = arith.constant 0 : index
      %c0_21 = arith.constant 0 : index
      %c0_22 = arith.constant 0 : index
      %c0_23 = arith.constant 0 : index
      %40 = vector.load %arg4[%c0_20, %c0_21, %c0_22, %c0_23] : memref<1x1x32x256xf32, #tpu.memory_space<vmem>>, vector<1x1x32x256xf32>
      %41 = vector.shape_cast %40 : vector<1x1x32x256xf32> to vector<32x256xf32>
      %42 = tpu.transpose %41, [1, 0] : vector<32x256xf32> -> vector<256x32xf32>
      %43 = arith.truncf %42 : vector<256x32xf32> to vector<256x32xbf16>
      %c0_24 = arith.constant 0 : index
      %c0_25 = arith.constant 0 : index
      %c0_26 = arith.constant 0 : index
      %44 = vector.load %arg7[%c0_24, %c0_25, %c0_26] : memref<1x256x32xbf16, #tpu.memory_space<vmem>>, vector<1x256x32xbf16>
      %45 = vector.shape_cast %44 : vector<1x256x32xbf16> to vector<256x32xbf16>
      %46 = vector.shape_cast %43 : vector<256x32xbf16> to vector<1x256x32xbf16>
      tpu.vector_store %arg7[%c0_24, %c0_25, %c0_26], %46 {strides = array<i32>} : memref<1x256x32xbf16, #tpu.memory_space<vmem>>, vector<1x256x32xbf16>,
      %c0_27 = arith.constant 0 : index
      %c0_28 = arith.constant 0 : index
      %c0_29 = arith.constant 0 : index
      %c0_30 = arith.constant 0 : index
      %47 = vector.load %arg5[%c0_27, %c0_28, %c0_29, %c0_30] : memref<1x1x32x256xf32, #tpu.memory_space<vmem>>, vector<1x1x32x256xf32>
      %48 = vector.shape_cast %47 : vector<1x1x32x256xf32> to vector<32x256xf32>
      %49 = arith.truncf %48 : vector<32x256xf32> to vector<32x256xbf16>
      %c0_31 = arith.constant 0 : index
      %c0_32 = arith.constant 0 : index
      %c0_33 = arith.constant 0 : index
      %50 = vector.load %arg8[%c0_31, %c0_32, %c0_33] : memref<1x32x256xbf16, #tpu.memory_space<vmem>>, vector<1x32x256xbf16>
      %51 = vector.shape_cast %50 : vector<1x32x256xbf16> to vector<32x256xbf16>
      %52 = vector.shape_cast %49 : vector<32x256xbf16> to vector<1x32x256xbf16>
      tpu.vector_store %arg8[%c0_31, %c0_32, %c0_33], %52 {strides = array<i32>} : memref<1x32x256xbf16, #tpu.memory_space<vmem>>, vector<1x32x256xbf16>,
    } else {
    }
    %c0 = arith.constant 0 : index
    %c0_1 = arith.constant 0 : index
    %c0_2 = arith.constant 0 : index
    %c0_3 = arith.constant 0 : index
    %3 = vector.load %arg3[%c0, %c0_1, %c0_2, %c0_3] : memref<1x1x32x256xf32, #tpu.memory_space<vmem>>, vector<1x1x32x256xf32>
    %4 = vector.shape_cast %3 : vector<1x1x32x256xf32> to vector<32x256xf32>
    %cst = arith.constant 0.176776692 : f32
    %5 = vector.broadcast %cst : f32 to vector<32x256xf32>
    %6 = arith.mulf %4, %5 : vector<32x256xf32>
    %7 = arith.truncf %6 : vector<32x256xf32> to vector<32x256xbf16>
    %cst_4 = arith.constant -1.000000e+30 : f32
    %8 = vector.broadcast %cst_4 : f32 to vector<1x256xf32>
    %cst_5 = arith.constant 0.000000e+00 : f32
    %9 = vector.broadcast %cst_5 : f32 to vector<1x256xf32>
    %cst_6 = arith.constant 0.000000e+00 : f32
    %10 = vector.broadcast %cst_6 : f32 to vector<32x256xf32>
    %c0_i32_7 = arith.constant 0 : i32
    %11 = arith.index_cast %c0_i32_7 : i32 to index
    %c0_8 = arith.constant 0 : index
    %c0_9 = arith.constant 0 : index
    %12 = vector.load %arg7[%11, %c0_8, %c0_9] : memref<1x256x32xbf16, #tpu.memory_space<vmem>>, vector<1x256x32xbf16>
    %13 = vector.shape_cast %12 : vector<1x256x32xbf16> to vector<256x32xbf16>
    %14 = arith.index_cast %c0_i32_7 : i32 to index
    %c0_10 = arith.constant 0 : index
    %c0_11 = arith.constant 0 : index
    %15 = vector.load %arg8[%14, %c0_10, %c0_11] : memref<1x32x256xbf16, #tpu.memory_space<vmem>>, vector<1x32x256xbf16>
    %16 = vector.shape_cast %15 : vector<1x32x256xbf16> to vector<32x256xbf16>
    %cst_12 = arith.constant dense<0.000000e+00> : vector<256x256xf32>
    %17 = tpu.matmul %13, %7, %cst_12 {dimension_numbers = #tpu.dot_dimension_numbers<[1], [0], [0], [1], [0, 0, 1, 1], [], []>} : vector<256x32xbf16>, vector<32x256xbf16>, vector<256x256xf32> -> vector<256x256xf32>
    %cst_13 = arith.constant dense<0xFF800000> : vector<256xf32>
    %18 = vector.multi_reduction <maximumf>, %17, %cst_13 [0] : vector<256x256xf32> to vector<256xf32>
    %19 = vector.shape_cast %18 : vector<256xf32> to vector<1x256xf32>
    %20 = arith.maximumf %8, %19 : vector<1x256xf32>
    %21 = arith.subf %8, %20 : vector<1x256xf32>
    %22 = math.exp %21 : vector<1x256xf32>
    %23 = vector.broadcast %20 : vector<1x256xf32> to vector<256x256xf32>
    %24 = arith.subf %17, %23 : vector<256x256xf32>
    %25 = math.exp %24 : vector<256x256xf32>
    %26 = arith.mulf %22, %9 : vector<1x256xf32>
    %cst_14 = arith.constant dense<0.000000e+00> : vector<256xf32>
    %27 = vector.multi_reduction <add>, %25, %cst_14 [0] : vector<256x256xf32> to vector<256xf32>
    %28 = vector.shape_cast %27 : vector<256xf32> to vector<1x256xf32>
    %29 = arith.addf %26, %28 : vector<1x256xf32>
    %30 = arith.truncf %25 : vector<256x256xf32> to vector<256x256xbf16>
    %cst_15 = arith.constant dense<0.000000e+00> : vector<32x256xf32>
    %31 = tpu.matmul %16, %30, %cst_15 {dimension_numbers = #tpu.dot_dimension_numbers<[1], [0], [0], [1], [0, 0, 1, 1], [], []>} : vector<32x256xbf16>, vector<256x256xbf16>, vector<32x256xf32> -> vector<32x256xf32>
    %32 = vector.broadcast %22 : vector<1x256xf32> to vector<32x256xf32>
    %33 = arith.mulf %32, %10 : vector<32x256xf32>
    %34 = arith.addf %33, %31 : vector<32x256xf32>
    %c1_i32 = arith.constant 1 : i32
    %35 = vector.broadcast %29 : vector<1x256xf32> to vector<32x256xf32>
    %36 = arith.divf %34, %35 : vector<32x256xf32>
    %c0_16 = arith.constant 0 : index
    %c0_17 = arith.constant 0 : index
    %c0_18 = arith.constant 0 : index
    %c0_19 = arith.constant 0 : index
    %37 = vector.load %arg6[%c0_16, %c0_17, %c0_18, %c0_19] : memref<1x1x32x256xf32, #tpu.memory_space<vmem>>, vector<1x1x32x256xf32>
    %38 = vector.shape_cast %37 : vector<1x1x32x256xf32> to vector<32x256xf32>
    %39 = vector.shape_cast %36 : vector<32x256xf32> to vector<1x1x32x256xf32>
    tpu.vector_store %arg6[%c0_16, %c0_17, %c0_18, %c0_19], %39 {strides = array<i32>} : memref<1x1x32x256xf32, #tpu.memory_space<vmem>>, vector<1x1x32x256xf32>,
    return
  }
  func.func @transform_0(%arg0: i32, %arg1: i32, %arg2: i32) -> (i32, i32, i32, i32) {
    %c0_i32 = arith.constant 0 : i32
    %c0_i32_0 = arith.constant 0 : i32
    return %arg0, %arg1, %c0_i32, %arg2 : i32, i32, i32, i32
  }
  func.func @transform_1(%arg0: i32, %arg1: i32, %arg2: i32) -> (i32, i32, i32, i32) {
    %c2_i32 = arith.constant 2 : i32
    %0 = arith.addi %c2_i32, %arg1 : i32
    %c0_i32 = arith.constant 0 : i32
    %c0_i32_0 = arith.constant 0 : i32
    %c0_i32_1 = arith.constant 0 : i32
    return %arg0, %0, %c0_i32, %c0_i32_0 : i32, i32, i32, i32
  }
  func.func @transform_2(%arg0: i32, %arg1: i32, %arg2: i32) -> (i32, i32, i32, i32) {
    %c4_i32 = arith.constant 4 : i32
    %0 = arith.addi %c4_i32, %arg1 : i32
    %c0_i32 = arith.constant 0 : i32
    %c0_i32_0 = arith.constant 0 : i32
    %c0_i32_1 = arith.constant 0 : i32
    return %arg0, %0, %c0_i32, %c0_i32_0 : i32, i32, i32, i32
  }
  func.func @transform_3(%arg0: i32, %arg1: i32, %arg2: i32) -> (i32, i32, i32, i32) {
    %c0_i32 = arith.constant 0 : i32
    %c0_i32_0 = arith.constant 0 : i32
    return %arg0, %arg1, %c0_i32, %arg2 : i32, i32, i32, i32
  }
}

</mosaic_0001>

<llo_original>
// kernel: tpu_custom_call.1
$region0: #{tpu_custom_call.1}
  #allocation0 [shape = 'u32[]', space=smem, size = 0x4, offset = 0x4, fixed_abs, tag = 'smem constant byte address 0x4 - core index']
  #allocation1 [shape = 'u32[144,128]{1,0:T(1,128)}', space=vmem, size = 0x12000, scoped, tag = 'internal scratch']
  #allocation2 [shape = 'bf16[1,256,32]{2,1,0:T(8,128)(2,1)}', space=vmem, size = 0x10000, scoped, tag = 'scratch operand']
  #allocation3 [shape = 'bf16[1,32,256]{2,1,0:T(8,128)(2,1)}', space=vmem, size = 0x4000, scoped, tag = 'scratch operand']
  %s0 = inlined_call_operand.hbm [shape: f32[2,6,32,256], index: 0, kind: input, shape index: {}]
  %s1 = inlined_call_operand.hbm [shape: f32[2,6,32,256], index: 1, kind: input, shape index: {}]
  %s2 = inlined_call_operand.hbm [shape: f32[2,6,32,256], index: 2, kind: input, shape index: {}]
  %s3 = inlined_call_operand.hbm [shape: f32[2,2,32,256], index: 3, kind: output, shape index: {}]
  %s4 = sld [smem:[#allocation0]]
  $region61: #{tpu_custom_call.1} parent=0
    _
  %s6 = ssub.s32 1, %s4
  %s7 = scalar_select 0, %s6, %s4
  $region1: #{tpu_custom_call.1} parent=0
    #allocation4 [shape = 'u8[65536]{0}', space=vmem, size = 0x10000, scoped, tag = 'input window, operand 0']
    #allocation5 [shape = 's32[2]{0}', space=sflag, size = 0x8, scoped, tag = 'scoped memory for tpu_custom_call.1']
    #allocation6 [shape = 's32[2]{0}', space=sflag, size = 0x8, scoped, tag = 'scoped memory for tpu_custom_call.1']
    #allocation7 [shape = 'u8[65536]{0}', space=vmem, size = 0x10000, scoped, tag = 'input window, operand 1']
    #allocation8 [shape = 's32[2]{0}', space=sflag, size = 0x8, scoped, tag = 'scoped memory for tpu_custom_call.1']
    #allocation9 [shape = 'u8[65536]{0}', space=vmem, size = 0x10000, scoped, tag = 'input window, operand 2']
    #allocation10 [shape = 'u8[65536]{0}', space=vmem, size = 0x10000, scoped, tag = 'output window, operand 0']
    %8 = vsyncpa [#allocation5], 0
    %s9 = scalar_lea.sflag [#allocation5], 1
    %10 = vsyncpa %s9, 0
    %11 = vsyncpa [#allocation8], 0
    %s12 = scalar_lea.sflag [#allocation8], 1
    %13 = vsyncpa %s12, 0
    %14 = vsyncpa [#allocation6], 0
    %s15 = scalar_lea.sflag [#allocation6], 1
    %16 = vsyncpa %s15, 0
    loop: start=0, step=1, limit=6
    $region2: #{tpu_custom_call.1} parent=1 // loop_pre_header
      _
    $region3: #{tpu_custom_call.1} parent=1 // loop_header
      %s18 = sphi 0, %s22
      %p19 = scmp.ge.s32.totalorder %s18, 6
      %s25 = sphi 0, %s44
      %s26 = sphi 0, %s40
      %s27 = sphi 0, %s36
      %s28 = sphi 0, %s25
      %s29 = sphi 0, %s26
      %s30 = sphi 0, %s27
      %s31 = sphi 0, %s28
      %s32 = sphi 0, %s29
      %s33 = sphi 0, %s30
      %s51 = sphi 0, %s53
      %s54 = sphi 0, %s51
      %s55 = sphi 0, %s54
      %s71 = sphi 0, %s55
      %s81 = sphi 0, %s83
      %s84 = sphi 0, %s81
      %s85 = sphi 0, %s84
      %s101 = sphi 0, %s85
      %s111 = sphi 0, %s113
      %s114 = sphi 0, %s111
      %s115 = sphi 0, %s114
      %s131 = sphi 0, %s115
      %s141 = sphi 0, %s143
      %s144 = sphi 0, %s141
      %s145 = sphi 0, %s144
      %s161 = sphi 0, %s145
    $region4: #{tpu_custom_call.1} parent=1 // loop_header_branch
      %21 = sbr.rel (%p19) target = $region8
    $region5: #{tpu_custom_call.1} parent=1 // loop_body
      %s23 = ssub.s32 %s18, 1
      %s24 = ssub.s32 %s18, 2
      %s34 = sadd.s32 1, %s27
      %p35 = scmp.ge.s32.totalorder %s34, 1
      %s36 = scalar_select %p35, 0, %s34
      %s37 = sadd.s32 1, %s26
      %s38 = scalar_select %p35, %s37, %s26
      %p39 = scmp.ge.s32.totalorder %s38, 2
      %s40 = scalar_select %p39, 0, %s38
      %s41 = sadd.s32 1, %s25
      %s42 = scalar_select %p39, %s41, %s25
      %p43 = scmp.ge.s32.totalorder %s42, 2
      %s44 = scalar_select %p43, 0, %s42
      %s45 = ssub.s32 %s25, %s44
      %s46 = ssub.s32 %s26, %s40
      %s47 = sor.u32 %s45, %s46
      %s48 = ssub.s32 %s27, %s36
      %s49 = sor.u32 %s47, %s48
      %p50 = scmp.eq.s32.totalorder %s49, 0
      %s52 = sadd.s32 %s51, 1
      %s53 = scalar_select %p50, %s51, %s52
      %p56 = pneg %p50
      %p57 = scmp.eq.s32.totalorder %s18, 3
      %p58 = por %p56, %p57
      %p59 = scmp.ne.s32.totalorder %s51, %s54
      %p60 = scmp.eq.s32.totalorder %s18, 0
      %p61 = por %p59, %p60
      %p62 = scmp.ne.s32.totalorder %s51, %s54
      %p63 = scmp.eq.s32.totalorder %s23, 3
      %p64 = por %p62, %p63
      %p65 = scmp.ne.s32.totalorder %s54, %s55
      %p66 = scmp.eq.s32.totalorder %s23, 0
      %p67 = por %p65, %p66
      %p68 = scmp.ne.s32.totalorder %s54, %s55
      %p69 = scmp.eq.s32.totalorder %s24, 3
      %p70 = por %p68, %p69
      %p72 = scmp.ne.s32.totalorder %s55, %s71
      %p73 = scmp.eq.s32.totalorder %s24, 0
      %p74 = por %p72, %p73
      %s75 = sadd.s32 %s26, 2
      %s76 = sadd.s32 %s40, 2
      %s77 = ssub.s32 %s25, %s44
      %s78 = ssub.s32 %s75, %s76
      %s79 = sor.u32 %s77, %s78
      %p80 = scmp.eq.s32.totalorder %s79, 0
      %s82 = sadd.s32 %s81, 1
      %s83 = scalar_select %p80, %s81, %s82
      %p86 = pneg %p80
      %p87 = scmp.eq.s32.totalorder %s18, 3
      %p88 = por %p86, %p87
      %p89 = scmp.ne.s32.totalorder %s81, %s84
      %p90 = scmp.eq.s32.totalorder %s18, 0
      %p91 = por %p89, %p90
      %p92 = scmp.ne.s32.totalorder %s81, %s84
      %p93 = scmp.eq.s32.totalorder %s23, 3
      %p94 = por %p92, %p93
      %p95 = scmp.ne.s32.totalorder %s84, %s85
      %p96 = scmp.eq.s32.totalorder %s23, 0
      %p97 = por %p95, %p96
      %p98 = scmp.ne.s32.totalorder %s84, %s85
      %p99 = scmp.eq.s32.totalorder %s24, 3
      %p100 = por %p98, %p99
      %p102 = scmp.ne.s32.totalorder %s85, %s101
      %p103 = scmp.eq.s32.totalorder %s24, 0
      %p104 = por %p102, %p103
      %s105 = sadd.s32 %s26, 4
      %s106 = sadd.s32 %s40, 4
      %s107 = ssub.s32 %s25, %s44
      %s108 = ssub.s32 %s105, %s106
      %s109 = sor.u32 %s107, %s108
      %p110 = scmp.eq.s32.totalorder %s109, 0
      %s112 = sadd.s32 %s111, 1
      %s113 = scalar_select %p110, %s111, %s112
      %p116 = pneg %p110
      %p117 = scmp.eq.s32.totalorder %s18, 3
      %p118 = por %p116, %p117
      %p119 = scmp.ne.s32.totalorder %s111, %s114
      %p120 = scmp.eq.s32.totalorder %s18, 0
      %p121 = por %p119, %p120
      %p122 = scmp.ne.s32.totalorder %s111, %s114
      %p123 = scmp.eq.s32.totalorder %s23, 3
      %p124 = por %p122, %p123
      %p125 = scmp.ne.s32.totalorder %s114, %s115
      %p126 = scmp.eq.s32.totalorder %s23, 0
      %p127 = por %p125, %p126
      %p128 = scmp.ne.s32.totalorder %s114, %s115
      %p129 = scmp.eq.s32.totalorder %s24, 3
      %p130 = por %p128, %p129
      %p132 = scmp.ne.s32.totalorder %s115, %s131
      %p133 = scmp.eq.s32.totalorder %s24, 0
      %p134 = por %p132, %p133
      %s135 = ssub.s32 %s25, %s44
      %s136 = ssub.s32 %s26, %s40
      %s137 = sor.u32 %s135, %s136
      %s138 = ssub.s32 %s27, %s36
      %s139 = sor.u32 %s137, %s138
      %p140 = scmp.eq.s32.totalorder %s139, 0
      %s142 = sadd.s32 %s141, 1
      %s143 = scalar_select %p140, %s141, %s142
      %p146 = pneg %p140
      %p147 = scmp.eq.s32.totalorder %s18, 3
      %p148 = por %p146, %p147
      %p149 = scmp.ne.s32.totalorder %s141, %s144
      %p150 = scmp.eq.s32.totalorder %s18, 0
      %p151 = por %p149, %p150
      %p152 = scmp.ne.s32.totalorder %s141, %s144
      %p153 = scmp.eq.s32.totalorder %s23, 3
      %p154 = por %p152, %p153
      %p155 = scmp.ne.s32.totalorder %s144, %s145
      %p156 = scmp.eq.s32.totalorder %s23, 0
      %p157 = por %p155, %p156
      %p158 = scmp.ne.s32.totalorder %s144, %s145
      %p159 = scmp.eq.s32.totalorder %s24, 3
      %p160 = por %p158, %p159
      %p162 = scmp.ne.s32.totalorder %s145, %s161
      %p163 = scmp.eq.s32.totalorder %s24, 0
      %p164 = por %p162, %p163
      %p165 = scmp.le.s32.totalorder 1, %s18
      %p166 = scmp.lt.s32.totalorder %s18, 5
      %p167 = pnand %p165, %p166
      %p168 = pneg %p167
      // Predicated region
      $region9: #{tpu_custom_call.1} parent=5 // pred_check
        _
      $region10: #{tpu_custom_call.1} parent=5 // pred_check_branch
        %170 = sbr.rel (%p167) target = $region12
      $region11: #{tpu_custom_call.1} parent=5 // pred_region
        %s171 = ssub.s32 %s18, 1
      $region12: #{tpu_custom_call.1} parent=5 // pred_fallthru
        _
      %p172 = scmp.lt.s32.totalorder %s18, 4
      // Predicated region
      $region13: #{tpu_custom_call.1} parent=5 // pred_check
        %p173 = pneg %p172
      $region14: #{tpu_custom_call.1} parent=5 // pred_check_branch
        %175 = sbr.rel (%p173) target = $region16
      $region15: #{tpu_custom_call.1} parent=5 // pred_region
        // Predicated region
        $region17: #{tpu_custom_call.1} parent=15 // pred_check
          %p176 = pneg %p61
        $region18: #{tpu_custom_call.1} parent=15 // pred_check_branch
          %178 = sbr.rel (%p176) target = $region20
        $region19: #{tpu_custom_call.1} parent=15 // pred_region
          %s179 = sand.u32 %s51, 1
          %s180 = scalar_lea.sflag [#allocation5], %s179
          %s181 = sand.u32 %s51, 1
          %s182 = smul.addr %s181, 64
          %s183 = scalar_lea.vmem [#allocation4], %s182
          %s184 = smul.u32 2, %s27
          %s186 = ssub.s32 1024, 1024
          %187 = vsyncadd %s180, %s186
          %s188 = smul.addr %s26, 8
          %s189 = sadd.s32 %s184, %s188
          %s190 = smul.addr %s25, 48
          %s191 = sadd.s32 %s189, %s190
          %s192 = smul.addr %s191, 128
          %s193 = scalar_lea.hbm %s0, %s192
          %s194 = sshll.u32 %s183, 4
          %s195 = int_to_ptr.vmem [resolvable:$true] %s194
          %200 = dma.hbm_to_vmem [thread:$0]  %s193, 1024, %s195, %s180, 256, 256, 16
        $region20: #{tpu_custom_call.1} parent=15 // pred_fallthru
          _
        // Predicated region
        $region21: #{tpu_custom_call.1} parent=15 // pred_check
          %p201 = pneg %p91
        $region22: #{tpu_custom_call.1} parent=15 // pred_check_branch
          %203 = sbr.rel (%p201) target = $region24
        $region23: #{tpu_custom_call.1} parent=15 // pred_region
          %s204 = sand.u32 %s18, 1
          %s205 = scalar_lea.sflag [#allocation8], %s204
          %s206 = sand.u32 %s81, 1
          %s207 = smul.addr %s206, 64
          %s208 = scalar_lea.vmem [#allocation7], %s207
          %s209 = sadd.s32 %s26, 2
          %s211 = ssub.s32 1024, 1024
          %212 = vsyncadd %s205, %s211
          %s213 = smul.addr %s209, 8
          %s214 = smul.addr %s25, 48
          %s215 = sadd.s32 %s213, %s214
          %s216 = smul.addr %s215, 128
          %s217 = scalar_lea.hbm %s1, %s216
          %s218 = sshll.u32 %s208, 4
          %s219 = int_to_ptr.vmem [resolvable:$true] %s218
          %224 = dma.hbm_to_vmem [thread:$0]  %s217, 1024, %s219, %s205, 256, 256, 16
        $region24: #{tpu_custom_call.1} parent=15 // pred_fallthru
          _
        // Predicated region
        $region25: #{tpu_custom_call.1} parent=15 // pred_check
          %p225 = pneg %p121
        $region26: #{tpu_custom_call.1} parent=15 // pred_check_branch
          %227 = sbr.rel (%p225) target = $region28
        $region27: #{tpu_custom_call.1} parent=15 // pred_region
          %s228 = sand.u32 %s18, 1
          %s229 = scalar_lea.sflag [#allocation8], %s228
          %s230 = sand.u32 %s111, 1
          %s231 = smul.addr %s230, 64
          %s232 = scalar_lea.vmem [#allocation9], %s231
          %s233 = sadd.s32 %s26, 4
          %s235 = ssub.s32 1024, 1024
          %236 = vsyncadd %s229, %s235
          %s237 = smul.addr %s233, 8
          %s238 = smul.addr %s25, 48
          %s239 = sadd.s32 %s237, %s238
          %s240 = smul.addr %s239, 128
          %s241 = scalar_lea.hbm %s2, %s240
          %s242 = sshll.u32 %s232, 4
          %s243 = int_to_ptr.vmem [resolvable:$true] %s242
          %248 = dma.hbm_to_vmem [thread:$0]  %s241, 1024, %s243, %s229, 256, 256, 16
        $region28: #{tpu_custom_call.1} parent=15 // pred_fallthru
          _
      $region16: #{tpu_custom_call.1} parent=5 // pred_fallthru
        _
      %p249 = scmp.le.s32.totalorder 1, %s18
      %p250 = scmp.lt.s32.totalorder %s18, 5
      %p251 = pnand %p249, %p250
      %p252 = pneg %p251
      // Predicated region
      $region29: #{tpu_custom_call.1} parent=5 // pred_check
        _
      $region30: #{tpu_custom_call.1} parent=5 // pred_check_branch
        %254 = sbr.rel (%p251) target = $region32
      $region31: #{tpu_custom_call.1} parent=5 // pred_region
        %s255 = ssub.s32 %s18, 1
        %s256 = sand.u32 %s54, 1
        %s257 = scalar_lea.sflag [#allocation5], %s256
        %s258 = sand.u32 %s54, 1
        %s259 = smul.addr %s258, 64
        %s260 = scalar_lea.vmem [#allocation4], %s259
        // Predicated region
        $region33: #{tpu_custom_call.1} parent=31 // pred_check
          %p261 = pneg %p67
        $region34: #{tpu_custom_call.1} parent=31 // pred_check_branch
          %263 = sbr.rel (%p261) target = $region36
        $region35: #{tpu_custom_call.1} parent=31 // pred_region
          %264 = dma.done %s257, 1024
        $region36: #{tpu_custom_call.1} parent=31 // pred_fallthru
          _
        %s265 = sand.u32 %s23, 1
        %s266 = scalar_lea.sflag [#allocation8], %s265
        %s267 = sand.u32 %s84, 1
        %s268 = smul.addr %s267, 64
        %s269 = scalar_lea.vmem [#allocation7], %s268
        // Predicated region
        $region37: #{tpu_custom_call.1} parent=31 // pred_check
          %p270 = pneg %p97
        $region38: #{tpu_custom_call.1} parent=31 // pred_check_branch
          %272 = sbr.rel (%p270) target = $region40
        $region39: #{tpu_custom_call.1} parent=31 // pred_region
          %273 = dma.done %s266, 1024
        $region40: #{tpu_custom_call.1} parent=31 // pred_fallthru
          _
        %s274 = sand.u32 %s23, 1
        %s275 = scalar_lea.sflag [#allocation8], %s274
        %s276 = sand.u32 %s114, 1
        %s277 = smul.addr %s276, 64
        %s278 = scalar_lea.vmem [#allocation9], %s277
        // Predicated region
        $region41: #{tpu_custom_call.1} parent=31 // pred_check
          %p279 = pneg %p127
        $region42: #{tpu_custom_call.1} parent=31 // pred_check_branch
          %281 = sbr.rel (%p279) target = $region44
        $region43: #{tpu_custom_call.1} parent=31 // pred_region
          %282 = dma.done %s275, 1024
        $region44: #{tpu_custom_call.1} parent=31 // pred_fallthru
          _
        %s283 = sand.u32 %s54, 1
        %s284 = scalar_lea.sflag [#allocation5], %s283
        %s285 = sand.u32 %s54, 1
        %s286 = smul.addr %s285, 64
        %s287 = scalar_lea.vmem [#allocation4], %s286
        %p288 = pneg %p67
        %p289 = pneg %p64
        %s290 = sand.u32 %s23, 1
        %s291 = scalar_lea.sflag [#allocation8], %s290
        %s292 = sand.u32 %s84, 1
        %s293 = smul.addr %s292, 64
        %s294 = scalar_lea.vmem [#allocation7], %s293
        %p295 = pneg %p97
        %p296 = pneg %p94
        %s297 = sand.u32 %s23, 1
        %s298 = scalar_lea.sflag [#allocation8], %s297
        %s299 = sand.u32 %s114, 1
        %s300 = smul.addr %s299, 64
        %s301 = scalar_lea.vmem [#allocation9], %s300
        %p302 = pneg %p127
        %p303 = pneg %p124
        %p304 = pneg %p157
        %p305 = pneg %p154
        %s306 = sand.u32 %s144, 1
        %s307 = scalar_lea.sflag [#allocation6], %s306
        %s308 = sand.u32 %s144, 1
        %s309 = smul.addr %s308, 64
        %s310 = scalar_lea.vmem [#allocation10], %s309
        %s311 = smul.u32 2, %s30
        %s312 = sadd.s32 %s29, 2
        %s313 = sadd.s32 %s29, 4
        %s314 = smul.u32 2, %s30
        %p316 = scmp.eq.s32.totalorder %s30, 0
        // Predicated region
        $region45: #{tpu_custom_call.1} parent=31 // pred_check
          %p317 = pneg %p316
        $region46: #{tpu_custom_call.1} parent=31 // pred_check_branch
          %319 = sbr.rel (%p317) target = $region48
        $region47: #{tpu_custom_call.1} parent=31 // pred_region
          %v320 = vld [vmem:[%s269] sm:$0xff]
          %v321 = vld [vmem:[%s269 + $0x8] sm:$0xff]
          %v322 = vld [vmem:[%s269 + $0x10] sm:$0xff]
          %v323 = vld [vmem:[%s269 + $0x18] sm:$0xff]
          %v324 = vld [vmem:[%s269 + $0x20] sm:$0xff]
          %v325 = vld [vmem:[%s269 + $0x28] sm:$0xff]
          %v326 = vld [vmem:[%s269 + $0x30] sm:$0xff]
          %v327 = vld [vmem:[%s269 + $0x38] sm:$0xff]
          %328 = vxpose.xlu0.b32.start [1/16] %v320, 128
          %329 = vxpose.xlu0.b32.cont [2/16] %v322, 128
          %330 = vxpose.xlu0.b32.cont [3/16] %v324, 128
          %331 = vxpose.xlu0.b32.cont [4/16] %v326, 128
          %332 = vxpose.xlu0.b32.cont [5/16] 0.0, 128
          %333 = vxpose.xlu0.b32.cont [6/16] 0.0, 128
          %334 = vxpose.xlu0.b32.cont [7/16] 0.0, 128
          %335 = vxpose.xlu0.b32.cont [8/16] 0.0, 128
          %336 = vxpose.xlu0.b32.cont [9/16] 0.0, 128
          %337 = vxpose.xlu0.b32.cont [10/16] 0.0, 128
          %338 = vxpose.xlu0.b32.cont [11/16] 0.0, 128
          %339 = vxpose.xlu0.b32.cont [12/16] 0.0, 128
          %340 = vxpose.xlu0.b32.cont [13/16] 0.0, 128
          %341 = vxpose.xlu0.b32.cont [14/16] 0.0, 128
          %342 = vxpose.xlu0.b32.cont [15/16] 0.0, 128
          %343 = vxpose.xlu0.b32.end [16/16] 0.0, 128
          %v344 = vpop.trf.xlu0
          %v345 = vpop.trf.xlu0
          %v346 = vpop.trf.xlu0
          %v347 = vpop.trf.xlu0
          %v348 = vpop.trf.xlu0
          %v349 = vpop.trf.xlu0
          %v350 = vpop.trf.xlu0
          %v351 = vpop.trf.xlu0
          %v352 = vpop.trf.xlu0
          %v353 = vpop.trf.xlu0
          %v354 = vpop.trf.xlu0
          %v355 = vpop.trf.xlu0
          %v356 = vpop.trf.xlu0
          %v357 = vpop.trf.xlu0
          %v358 = vpop.trf.xlu0
          %v359 = vpop.trf.xlu0
          %360 = vxpose.xlu0.b32.start [1/16] %v321, 128
          %361 = vxpose.xlu0.b32.cont [2/16] %v323, 128
          %362 = vxpose.xlu0.b32.cont [3/16] %v325, 128
          %363 = vxpose.xlu0.b32.cont [4/16] %v327, 128
          %364 = vxpose.xlu0.b32.cont [5/16] 0.0, 128
          %365 = vxpose.xlu0.b32.cont [6/16] 0.0, 128
          %366 = vxpose.xlu0.b32.cont [7/16] 0.0, 128
          %367 = vxpose.xlu0.b32.cont [8/16] 0.0, 128
          %368 = vxpose.xlu0.b32.cont [9/16] 0.0, 128
          %369 = vxpose.xlu0.b32.cont [10/16] 0.0, 128
          %370 = vxpose.xlu0.b32.cont [11/16] 0.0, 128
          %371 = vxpose.xlu0.b32.cont [12/16] 0.0, 128
          %372 = vxpose.xlu0.b32.cont [13/16] 0.0, 128
          %373 = vxpose.xlu0.b32.cont [14/16] 0.0, 128
          %374 = vxpose.xlu0.b32.cont [15/16] 0.0, 128
          %375 = vxpose.xlu0.b32.end [16/16] 0.0, 128
          %v376 = vpop.trf.xlu0
          %v377 = vpop.trf.xlu0
          %v378 = vpop.trf.xlu0
          %v379 = vpop.trf.xlu0
          %v380 = vpop.trf.xlu0
          %v381 = vpop.trf.xlu0
          %v382 = vpop.trf.xlu0
          %v383 = vpop.trf.xlu0
          %v384 = vpop.trf.xlu0
          %v385 = vpop.trf.xlu0
          %v386 = vpop.trf.xlu0
          %v387 = vpop.trf.xlu0
          %v388 = vpop.trf.xlu0
          %v389 = vpop.trf.xlu0
          %v390 = vpop.trf.xlu0
          %v391 = vpop.trf.xlu0
          %v392 = vpack.c.bf16 %v345, %v344
          %v393 = vpack.c.bf16 %v347, %v346
          %v394 = vpack.c.bf16 %v349, %v348
          %v395 = vpack.c.bf16 %v351, %v350
          %v396 = vpack.c.bf16 %v353, %v352
          %v397 = vpack.c.bf16 %v355, %v354
          %v398 = vpack.c.bf16 %v357, %v356
          %v399 = vpack.c.bf16 %v359, %v358
          %v400 = vpack.c.bf16 %v377, %v376
          %v401 = vpack.c.bf16 %v379, %v378
          %v402 = vpack.c.bf16 %v381, %v380
          %v403 = vpack.c.bf16 %v383, %v382
          %v404 = vpack.c.bf16 %v385, %v384
          %v405 = vpack.c.bf16 %v387, %v386
          %v406 = vpack.c.bf16 %v389, %v388
          %v407 = vpack.c.bf16 %v391, %v390
          %v424 = vunpack.c.l.b16 %v392
          %v425 = vunpack.c.h.b16 %v392
          %v426 = vunpack.c.l.b16 %v393
          %v427 = vunpack.c.h.b16 %v393
          %v428 = vunpack.c.l.b16 %v394
          %v429 = vunpack.c.h.b16 %v394
          %v430 = vunpack.c.l.b16 %v395
          %v431 = vunpack.c.h.b16 %v395
          %v432 = vunpack.c.l.b16 %v396
          %v433 = vunpack.c.h.b16 %v396
          %v434 = vunpack.c.l.b16 %v397
          %v435 = vunpack.c.h.b16 %v397
          %v436 = vunpack.c.l.b16 %v398
          %v437 = vunpack.c.h.b16 %v398
          %v438 = vunpack.c.l.b16 %v399
          %v439 = vunpack.c.h.b16 %v399
          %v440 = vunpack.c.l.b16 %v400
          %v441 = vunpack.c.h.b16 %v400
          %v442 = vunpack.c.l.b16 %v401
          %v443 = vunpack.c.h.b16 %v401
          %v444 = vunpack.c.l.b16 %v402
          %v445 = vunpack.c.h.b16 %v402
          %v446 = vunpack.c.l.b16 %v403
          %v447 = vunpack.c.h.b16 %v403
          %v448 = vunpack.c.l.b16 %v404
          %v449 = vunpack.c.h.b16 %v404
          %v450 = vunpack.c.l.b16 %v405
          %v451 = vunpack.c.h.b16 %v405
          %v452 = vunpack.c.l.b16 %v406
          %v453 = vunpack.c.h.b16 %v406
          %v454 = vunpack.c.l.b16 %v407
          %v455 = vunpack.c.h.b16 %v407
          %v456 = vpack.c.b16 %v424, %v424
          %v457 = vpack.c.b16 %v425, %v425
          %v458 = vpack.c.b16 %v426, %v426
          %v459 = vpack.c.b16 %v427, %v427
          %v460 = vpack.c.b16 %v428, %v428
          %v461 = vpack.c.b16 %v429, %v429
          %v462 = vpack.c.b16 %v430, %v430
          %v463 = vpack.c.b16 %v431, %v431
          %v464 = vpack.c.b16 %v432, %v432
          %v465 = vpack.c.b16 %v433, %v433
          %v466 = vpack.c.b16 %v434, %v434
          %v467 = vpack.c.b16 %v435, %v435
          %v468 = vpack.c.b16 %v436, %v436
          %v469 = vpack.c.b16 %v437, %v437
          %v470 = vpack.c.b16 %v438, %v438
          %v471 = vpack.c.b16 %v439, %v439
          %v472 = vpack.c.b16 %v440, %v440
          %v473 = vpack.c.b16 %v441, %v441
          %v474 = vpack.c.b16 %v442, %v442
          %v475 = vpack.c.b16 %v443, %v443
          %v476 = vpack.c.b16 %v444, %v444
          %v477 = vpack.c.b16 %v445, %v445
          %v478 = vpack.c.b16 %v446, %v446
          %v479 = vpack.c.b16 %v447, %v447
          %v480 = vpack.c.b16 %v448, %v448
          %v481 = vpack.c.b16 %v449, %v449
          %v482 = vpack.c.b16 %v450, %v450
          %v483 = vpack.c.b16 %v451, %v451
          %v484 = vpack.c.b16 %v452, %v452
          %v485 = vpack.c.b16 %v453, %v453
          %v486 = vpack.c.b16 %v454, %v454
          %v487 = vpack.c.b16 %v455, %v455
          %vm520 = vcmask 257024
          %521 = vst.msk [vmem:[#allocation2] sm:$0xf] %vm520, %v456
          %522 = vst.msk [vmem:[#allocation2 + $0x4] sm:$0xf] %vm520, %v457
          %523 = vst.msk [vmem:[#allocation2 + $0x8] sm:$0xf] %vm520, %v458
          %524 = vst.msk [vmem:[#allocation2 + $0xc] sm:$0xf] %vm520, %v459
          %525 = vst.msk [vmem:[#allocation2 + $0x10] sm:$0xf] %vm520, %v460
          %526 = vst.msk [vmem:[#allocation2 + $0x14] sm:$0xf] %vm520, %v461
          %527 = vst.msk [vmem:[#allocation2 + $0x18] sm:$0xf] %vm520, %v462
          %528 = vst.msk [vmem:[#allocation2 + $0x1c] sm:$0xf] %vm520, %v463
          %529 = vst.msk [vmem:[#allocation2 + $0x20] sm:$0xf] %vm520, %v464
          %530 = vst.msk [vmem:[#allocation2 + $0x24] sm:$0xf] %vm520, %v465
          %531 = vst.msk [vmem:[#allocation2 + $0x28] sm:$0xf] %vm520, %v466
          %532 = vst.msk [vmem:[#allocation2 + $0x2c] sm:$0xf] %vm520, %v467
          %533 = vst.msk [vmem:[#allocation2 + $0x30] sm:$0xf] %vm520, %v468
          %534 = vst.msk [vmem:[#allocation2 + $0x34] sm:$0xf] %vm520, %v469
          %535 = vst.msk [vmem:[#allocation2 + $0x38] sm:$0xf] %vm520, %v470
          %536 = vst.msk [vmem:[#allocation2 + $0x3c] sm:$0xf] %vm520, %v471
          %537 = vst.msk [vmem:[#allocation2 + $0x40] sm:$0xf] %vm520, %v472
          %538 = vst.msk [vmem:[#allocation2 + $0x44] sm:$0xf] %vm520, %v473
          %539 = vst.msk [vmem:[#allocation2 + $0x48] sm:$0xf] %vm520, %v474
          %540 = vst.msk [vmem:[#allocation2 + $0x4c] sm:$0xf] %vm520, %v475
          %541 = vst.msk [vmem:[#allocation2 + $0x50] sm:$0xf] %vm520, %v476
          %542 = vst.msk [vmem:[#allocation2 + $0x54] sm:$0xf] %vm520, %v477
          %543 = vst.msk [vmem:[#allocation2 + $0x58] sm:$0xf] %vm520, %v478
          %544 = vst.msk [vmem:[#allocation2 + $0x5c] sm:$0xf] %vm520, %v479
          %545 = vst.msk [vmem:[#allocation2 + $0x60] sm:$0xf] %vm520, %v480
          %546 = vst.msk [vmem:[#allocation2 + $0x64] sm:$0xf] %vm520, %v481
          %547 = vst.msk [vmem:[#allocation2 + $0x68] sm:$0xf] %vm520, %v482
          %548 = vst.msk [vmem:[#allocation2 + $0x6c] sm:$0xf] %vm520, %v483
          %549 = vst.msk [vmem:[#allocation2 + $0x70] sm:$0xf] %vm520, %v484
          %550 = vst.msk [vmem:[#allocation2 + $0x74] sm:$0xf] %vm520, %v485
          %551 = vst.msk [vmem:[#allocation2 + $0x78] sm:$0xf] %vm520, %v486
          %552 = vst.msk [vmem:[#allocation2 + $0x7c] sm:$0xf] %vm520, %v487
          %v553 = vld [vmem:[%s278] sm:$0xff]
          %v554 = vld [vmem:[%s278 + $0x8] sm:$0xff]
          %v555 = vld [vmem:[%s278 + $0x10] sm:$0xff]
          %v556 = vld [vmem:[%s278 + $0x18] sm:$0xff]
          %v557 = vld [vmem:[%s278 + $0x20] sm:$0xff]
          %v558 = vld [vmem:[%s278 + $0x28] sm:$0xff]
          %v559 = vld [vmem:[%s278 + $0x30] sm:$0xff]
          %v560 = vld [vmem:[%s278 + $0x38] sm:$0xff]
          %v561 = vpack.c.bf16 %v555, %v553
          %v562 = vpack.c.bf16 %v556, %v554
          %v563 = vpack.c.bf16 %v559, %v557
          %v564 = vpack.c.bf16 %v560, %v558
          %v569 = vunpack.c.l.b16 %v561
          %v570 = vunpack.c.l.b16 %v562
          %v571 = vunpack.c.h.b16 %v561
          %v572 = vunpack.c.h.b16 %v562
          %v573 = vunpack.c.l.b16 %v563
          %v574 = vunpack.c.l.b16 %v564
          %v575 = vunpack.c.h.b16 %v563
          %v576 = vunpack.c.h.b16 %v564
          %v577 = vpack.c.b16 %v570, %v569
          %v578 = vpack.c.b16 %v572, %v571
          %v579 = vpack.c.b16 %v574, %v573
          %v580 = vpack.c.b16 %v576, %v575
          %585 = vst [vmem:[#allocation3] sm:$0xff] %v577
          %586 = vst [vmem:[#allocation3 + $0x8] sm:$0xff] %v578
          %587 = vst [vmem:[#allocation3 + $0x10] sm:$0xff] %v579
          %588 = vst [vmem:[#allocation3 + $0x18] sm:$0xff] %v580
        $region48: #{tpu_custom_call.1} parent=31 // pred_fallthru
          _
        %v589 = vld [vmem:[%s260] sm:$0xff]
        %v590 = vld [vmem:[%s260 + $0x8] sm:$0xff]
        %v591 = vld [vmem:[%s260 + $0x10] sm:$0xff]
        %v592 = vld [vmem:[%s260 + $0x18] sm:$0xff]
        %v593 = vld [vmem:[%s260 + $0x20] sm:$0xff]
        %v594 = vld [vmem:[%s260 + $0x28] sm:$0xff]
        %v595 = vld [vmem:[%s260 + $0x30] sm:$0xff]
        %v596 = vld [vmem:[%s260 + $0x38] sm:$0xff]
        %v597 = vmul.f32 %v589, 0.17677669
        %v598 = vmul.f32 %v590, 0.17677669
        %v599 = vmul.f32 %v591, 0.17677669
        %v600 = vmul.f32 %v592, 0.17677669
        %v601 = vmul.f32 %v593, 0.17677669
        %v602 = vmul.f32 %v594, 0.17677669
        %v603 = vmul.f32 %v595, 0.17677669
        %v604 = vmul.f32 %v596, 0.17677669
        %v605 = vpack.c.bf16 %v599, %v597
        %v606 = vpack.c.bf16 %v600, %v598
        %v607 = vpack.c.bf16 %v603, %v601
        %v608 = vpack.c.bf16 %v604, %v602
        %v609 = vld [vmem:[#allocation2] sm:$0xf]
        %v610 = vld [vmem:[#allocation2 + $0x4] sm:$0xf]
        %v611 = vld [vmem:[#allocation2 + $0x8] sm:$0xf]
        %v612 = vld [vmem:[#allocation2 + $0xc] sm:$0xf]
        %v613 = vld [vmem:[#allocation2 + $0x10] sm:$0xf]
        %v614 = vld [vmem:[#allocation2 + $0x14] sm:$0xf]
        %v615 = vld [vmem:[#allocation2 + $0x18] sm:$0xf]
        %v616 = vld [vmem:[#allocation2 + $0x1c] sm:$0xf]
        %v617 = vld [vmem:[#allocation2 + $0x20] sm:$0xf]
        %v618 = vld [vmem:[#allocation2 + $0x24] sm:$0xf]
        %v619 = vld [vmem:[#allocation2 + $0x28] sm:$0xf]
        %v620 = vld [vmem:[#allocation2 + $0x2c] sm:$0xf]
        %v621 = vld [vmem:[#allocation2 + $0x30] sm:$0xf]
        %v622 = vld [vmem:[#allocation2 + $0x34] sm:$0xf]
        %v623 = vld [vmem:[#allocation2 + $0x38] sm:$0xf]
        %v624 = vld [vmem:[#allocation2 + $0x3c] sm:$0xf]
        %v625 = vld [vmem:[#allocation2 + $0x40] sm:$0xf]
        %v626 = vld [vmem:[#allocation2 + $0x44] sm:$0xf]
        %v627 = vld [vmem:[#allocation2 + $0x48] sm:$0xf]
        %v628 = vld [vmem:[#allocation2 + $0x4c] sm:$0xf]
        %v629 = vld [vmem:[#allocation2 + $0x50] sm:$0xf]
        %v630 = vld [vmem:[#allocation2 + $0x54] sm:$0xf]
        %v631 = vld [vmem:[#allocation2 + $0x58] sm:$0xf]
        %v632 = vld [vmem:[#allocation2 + $0x5c] sm:$0xf]
        %v633 = vld [vmem:[#allocation2 + $0x60] sm:$0xf]
        %v634 = vld [vmem:[#allocation2 + $0x64] sm:$0xf]
        %v635 = vld [vmem:[#allocation2 + $0x68] sm:$0xf]
        %v636 = vld [vmem:[#allocation2 + $0x6c] sm:$0xf]
        %v637 = vld [vmem:[#allocation2 + $0x70] sm:$0xf]
        %v638 = vld [vmem:[#allocation2 + $0x74] sm:$0xf]
        %v639 = vld [vmem:[#allocation2 + $0x78] sm:$0xf]
        %v640 = vld [vmem:[#allocation2 + $0x7c] sm:$0xf]
        %v641 = vld [vmem:[#allocation3] sm:$0xff]
        %v642 = vld [vmem:[#allocation3 + $0x8] sm:$0xff]
        %v643 = vld [vmem:[#allocation3 + $0x10] sm:$0xff]
        %v644 = vld [vmem:[#allocation3 + $0x18] sm:$0xff]
        %v677 = vunpack.c.l.b16 %v609
        %v678 = vunpack.c.l.b16 %v610
        %v679 = vunpack.c.l.b16 %v611
        %v680 = vunpack.c.l.b16 %v612
        %v681 = vunpack.c.l.b16 %v613
        %v682 = vunpack.c.l.b16 %v614
        %v683 = vunpack.c.l.b16 %v615
        %v684 = vunpack.c.l.b16 %v616
        %v685 = vunpack.c.l.b16 %v617
        %v686 = vunpack.c.l.b16 %v618
        %v687 = vunpack.c.l.b16 %v619
        %v688 = vunpack.c.l.b16 %v620
        %v689 = vunpack.c.l.b16 %v621
        %v690 = vunpack.c.l.b16 %v622
        %v691 = vunpack.c.l.b16 %v623
        %v692 = vunpack.c.l.b16 %v624
        %v693 = vunpack.c.l.b16 %v625
        %v694 = vunpack.c.l.b16 %v626
        %v695 = vunpack.c.l.b16 %v627
        %v696 = vunpack.c.l.b16 %v628
        %v697 = vunpack.c.l.b16 %v629
        %v698 = vunpack.c.l.b16 %v630
        %v699 = vunpack.c.l.b16 %v631
        %v700 = vunpack.c.l.b16 %v632
        %v701 = vunpack.c.l.b16 %v633
        %v702 = vunpack.c.l.b16 %v634
        %v703 = vunpack.c.l.b16 %v635
        %v704 = vunpack.c.l.b16 %v636
        %v705 = vunpack.c.l.b16 %v637
        %v706 = vunpack.c.l.b16 %v638
        %v707 = vunpack.c.l.b16 %v639
        %v708 = vunpack.c.l.b16 %v640
        %v709 = vpack.c.b16 %v678, %v677
        %v710 = vpack.c.b16 %v680, %v679
        %v711 = vpack.c.b16 %v682, %v681
        %v712 = vpack.c.b16 %v684, %v683
        %v713 = vpack.c.b16 %v686, %v685
        %v714 = vpack.c.b16 %v688, %v687
        %v715 = vpack.c.b16 %v690, %v689
        %v716 = vpack.c.b16 %v692, %v691
        %v717 = vpack.c.b16 %v694, %v693
        %v718 = vpack.c.b16 %v696, %v695
        %v719 = vpack.c.b16 %v698, %v697
        %v720 = vpack.c.b16 %v700, %v699
        %v721 = vpack.c.b16 %v702, %v701
        %v722 = vpack.c.b16 %v704, %v703
        %v723 = vpack.c.b16 %v706, %v705
        %v724 = vpack.c.b16 %v708, %v707
        %vm725 = vcmask 261120
        %v727 = vsel %vm725, %v709, 0
        %v730 = vsel %vm725, %v710, 0
        %v733 = vsel %vm725, %v711, 0
        %v736 = vsel %vm725, %v712, 0
        %v739 = vsel %vm725, %v713, 0
        %v742 = vsel %vm725, %v714, 0
        %v745 = vsel %vm725, %v715, 0
        %v748 = vsel %vm725, %v716, 0
        %v751 = vsel %vm725, %v717, 0
        %v754 = vsel %vm725, %v718, 0
        %v757 = vsel %vm725, %v719, 0
        %v760 = vsel %vm725, %v720, 0
        %v763 = vsel %vm725, %v721, 0
        %v766 = vsel %vm725, %v722, 0
        %v769 = vsel %vm725, %v723, 0
        %v772 = vsel %vm725, %v724, 0
        %774 = vmatprep.subr.bf16.mxu0 0
        %775 = vmatpush1.bf16.msra.mxu0 0
        %776 = vmatprep.subr.bf16.mxu0 0
        %777 = vmatpush1.bf16.msra.mxu0 0
        %778 = vmatprep.subr.bf16.mxu0 0
        %779 = vmatpush1.bf16.msra.mxu0 0
        %780 = vmatprep.subr.bf16.mxu0 0
        %781 = vmatpush1.bf16.msra.mxu0 0
        %782 = vmatprep.subr.bf16.mxu0 0
        %783 = vmatpush1.bf16.msra.mxu0 0
        %784 = vmatprep.subr.bf16.mxu0 0
        %785 = vmatpush1.bf16.msra.mxu0 0
        %786 = vmatprep.subr.bf16.mxu0 %v608
        %787 = vmatpush1.bf16.msra.mxu0 %v607
        %788 = vmatprep.subr.bf16.mxu0 %v606
        %789 = vmatpush1.bf16.msra.mxu0 %v605
        %790 = vmatprep.subr.bf16.mxu0 0
        %791 = vmatpush2.bf16.msra.mxu0 0
        %792 = vmatprep.subr.bf16.mxu0 0
        %793 = vmatpush2.bf16.msra.mxu0 0
        %794 = vmatprep.subr.bf16.mxu0 0
        %795 = vmatpush2.bf16.msra.mxu0 0
        %796 = vmatprep.subr.bf16.mxu0 0
        %797 = vmatpush2.bf16.msra.mxu0 0
        %798 = vmatprep.subr.bf16.mxu0 0
        %799 = vmatpush2.bf16.msra.mxu0 0
        %800 = vmatprep.subr.bf16.mxu0 0
        %801 = vmatpush2.bf16.msra.mxu0 0
        %802 = vmatprep.subr.bf16.mxu0 0
        %803 = vmatpush2.bf16.msra.mxu0 0
        %804 = vmatprep.subr.bf16.mxu0 0
        %805 = vmatpush2.bf16.msra.mxu0 0
        %806 = vmatprep.mubr.bf16.mxu0 0
        %807 = vmatmul.mubr.bf16.gmra.mxu0 %v727
        %v808 = vpop.f32.mrf.mxu0
        %v809 = vadd.f32 0.0, %v808
        %v810 = vpop.f32.mrf.mxu0
        %v811 = vadd.f32 0.0, %v810
        %v812 = vpop.f32.mrf.mxu0
        %v813 = vadd.f32 0.0, %v812
        %v814 = vpop.f32.mrf.mxu0
        %v815 = vadd.f32 0.0, %v814
        %816 = vmatprep.mubr.bf16.mxu0 0
        %817 = vmatmul.mubr.bf16.gmra.mxu0 %v730
        %v818 = vpop.f32.mrf.mxu0
        %v819 = vadd.f32 0.0, %v818
        %v820 = vpop.f32.mrf.mxu0
        %v821 = vadd.f32 0.0, %v820
        %v822 = vpop.f32.mrf.mxu0
        %v823 = vadd.f32 0.0, %v822
        %v824 = vpop.f32.mrf.mxu0
        %v825 = vadd.f32 0.0, %v824
        %826 = vmatprep.mubr.bf16.mxu0 0
        %827 = vmatmul.mubr.bf16.gmra.mxu0 %v733
        %v828 = vpop.f32.mrf.mxu0
        %v829 = vadd.f32 0.0, %v828
        %v830 = vpop.f32.mrf.mxu0
        %v831 = vadd.f32 0.0, %v830
        %v832 = vpop.f32.mrf.mxu0
        %v833 = vadd.f32 0.0, %v832
        %v834 = vpop.f32.mrf.mxu0
        %v835 = vadd.f32 0.0, %v834
        %836 = vmatprep.mubr.bf16.mxu0 0
        %837 = vmatmul.mubr.bf16.gmra.mxu0 %v736
        %v838 = vpop.f32.mrf.mxu0
        %v839 = vadd.f32 0.0, %v838
        %v840 = vpop.f32.mrf.mxu0
        %v841 = vadd.f32 0.0, %v840
        %v842 = vpop.f32.mrf.mxu0
        %v843 = vadd.f32 0.0, %v842
        %v844 = vpop.f32.mrf.mxu0
        %v845 = vadd.f32 0.0, %v844
        %846 = vmatprep.mubr.bf16.mxu0 0
        %847 = vmatmul.mubr.bf16.gmra.mxu0 %v739
        %v848 = vpop.f32.mrf.mxu0
        %v849 = vadd.f32 0.0, %v848
        %v850 = vpop.f32.mrf.mxu0
        %v851 = vadd.f32 0.0, %v850
        %v852 = vpop.f32.mrf.mxu0
        %v853 = vadd.f32 0.0, %v852
        %v854 = vpop.f32.mrf.mxu0
        %v855 = vadd.f32 0.0, %v854
        %856 = vmatprep.mubr.bf16.mxu0 0
        %857 = vmatmul.mubr.bf16.gmra.mxu0 %v742
        %v858 = vpop.f32.mrf.mxu0
        %v859 = vadd.f32 0.0, %v858
        %v860 = vpop.f32.mrf.mxu0
        %v861 = vadd.f32 0.0, %v860
        %v862 = vpop.f32.mrf.mxu0
        %v863 = vadd.f32 0.0, %v862
        %v864 = vpop.f32.mrf.mxu0
        %v865 = vadd.f32 0.0, %v864
        %866 = vmatprep.mubr.bf16.mxu0 0
        %867 = vmatmul.mubr.bf16.gmra.mxu0 %v745
        %v868 = vpop.f32.mrf.mxu0
        %v869 = vadd.f32 0.0, %v868
        %v870 = vpop.f32.mrf.mxu0
        %v871 = vadd.f32 0.0, %v870
        %v872 = vpop.f32.mrf.mxu0
        %v873 = vadd.f32 0.0, %v872
        %v874 = vpop.f32.mrf.mxu0
        %v875 = vadd.f32 0.0, %v874
        %876 = vmatprep.mubr.bf16.mxu0 0
        %877 = vmatmul.mubr.bf16.gmra.mxu0 %v748
        %v878 = vpop.f32.mrf.mxu0
        %v879 = vadd.f32 0.0, %v878
        %v880 = vpop.f32.mrf.mxu0
        %v881 = vadd.f32 0.0, %v880
        %v882 = vpop.f32.mrf.mxu0
        %v883 = vadd.f32 0.0, %v882
        %v884 = vpop.f32.mrf.mxu0
        %v885 = vadd.f32 0.0, %v884
        %886 = vmatprep.mubr.bf16.mxu0 0
        %887 = vmatmul.mubr.bf16.gmra.mxu0 %v751
        %v888 = vpop.f32.mrf.mxu0
        %v889 = vadd.f32 0.0, %v888
        %v890 = vpop.f32.mrf.mxu0
        %v891 = vadd.f32 0.0, %v890
        %v892 = vpop.f32.mrf.mxu0
        %v893 = vadd.f32 0.0, %v892
        %v894 = vpop.f32.mrf.mxu0
        %v895 = vadd.f32 0.0, %v894
        %896 = vmatprep.mubr.bf16.mxu0 0
        %897 = vmatmul.mubr.bf16.gmra.mxu0 %v754
        %v898 = vpop.f32.mrf.mxu0
        %v899 = vadd.f32 0.0, %v898
        %v900 = vpop.f32.mrf.mxu0
        %v901 = vadd.f32 0.0, %v900
        %v902 = vpop.f32.mrf.mxu0
        %v903 = vadd.f32 0.0, %v902
        %v904 = vpop.f32.mrf.mxu0
        %v905 = vadd.f32 0.0, %v904
        %906 = vmatprep.mubr.bf16.mxu0 0
        %907 = vmatmul.mubr.bf16.gmra.mxu0 %v757
        %v908 = vpop.f32.mrf.mxu0
        %v909 = vadd.f32 0.0, %v908
        %v910 = vpop.f32.mrf.mxu0
        %v911 = vadd.f32 0.0, %v910
        %v912 = vpop.f32.mrf.mxu0
        %v913 = vadd.f32 0.0, %v912
        %v914 = vpop.f32.mrf.mxu0
        %v915 = vadd.f32 0.0, %v914
        %916 = vmatprep.mubr.bf16.mxu0 0
        %917 = vmatmul.mubr.bf16.gmra.mxu0 %v760
        %v918 = vpop.f32.mrf.mxu0
        %v919 = vadd.f32 0.0, %v918
        %v920 = vpop.f32.mrf.mxu0
        %v921 = vadd.f32 0.0, %v920
        %v922 = vpop.f32.mrf.mxu0
        %v923 = vadd.f32 0.0, %v922
        %v924 = vpop.f32.mrf.mxu0
        %v925 = vadd.f32 0.0, %v924
        %926 = vmatprep.mubr.bf16.mxu0 0
        %927 = vmatmul.mubr.bf16.gmra.mxu0 %v763
        %v928 = vpop.f32.mrf.mxu0
        %v929 = vadd.f32 0.0, %v928
        %v930 = vpop.f32.mrf.mxu0
        %v931 = vadd.f32 0.0, %v930
        %v932 = vpop.f32.mrf.mxu0
        %v933 = vadd.f32 0.0, %v932
        %v934 = vpop.f32.mrf.mxu0
        %v935 = vadd.f32 0.0, %v934
        %936 = vmatprep.mubr.bf16.mxu0 0
        %937 = vmatmul.mubr.bf16.gmra.mxu0 %v766
        %v938 = vpop.f32.mrf.mxu0
        %v939 = vadd.f32 0.0, %v938
        %v940 = vpop.f32.mrf.mxu0
        %v941 = vadd.f32 0.0, %v940
        %v942 = vpop.f32.mrf.mxu0
        %v943 = vadd.f32 0.0, %v942
        %v944 = vpop.f32.mrf.mxu0
        %v945 = vadd.f32 0.0, %v944
        %946 = vmatprep.mubr.bf16.mxu0 0
        %947 = vmatmul.mubr.bf16.gmra.mxu0 %v769
        %v948 = vpop.f32.mrf.mxu0
        %v949 = vadd.f32 0.0, %v948
        %v950 = vpop.f32.mrf.mxu0
        %v951 = vadd.f32 0.0, %v950
        %v952 = vpop.f32.mrf.mxu0
        %v953 = vadd.f32 0.0, %v952
        %v954 = vpop.f32.mrf.mxu0
        %v955 = vadd.f32 0.0, %v954
        %956 = vmatprep.mubr.bf16.mxu0 0
        %957 = vmatmul.mubr.bf16.gmra.mxu0 %v772
        %v958 = vpop.f32.mrf.mxu0
        %v959 = vadd.f32 0.0, %v958
        %v960 = vpop.f32.mrf.mxu0
        %v961 = vadd.f32 0.0, %v960
        %v962 = vpop.f32.mrf.mxu0
        %v963 = vadd.f32 0.0, %v962
        %v964 = vpop.f32.mrf.mxu0
        %v965 = vadd.f32 0.0, %v964
        %966 = vdwg.mxu0
        %v967 = vmax.f32 %v809, %v819
        %v968 = vmax.f32 %v813, %v823
        %v969 = vmax.f32 %v967, %v829
        %v970 = vmax.f32 %v968, %v833
        %v971 = vmax.f32 %v969, %v839
        %v972 = vmax.f32 %v970, %v843
        %v973 = vmax.f32 %v971, %v849
        %v974 = vmax.f32 %v972, %v853
        %v975 = vmax.f32 %v973, %v859
        %v976 = vmax.f32 %v974, %v863
        %v977 = vmax.f32 %v975, %v869
        %v978 = vmax.f32 %v976, %v873
        %v979 = vmax.f32 %v977, %v879
        %v980 = vmax.f32 %v978, %v883
        %v981 = vmax.f32 %v979, %v889
        %v982 = vmax.f32 %v980, %v893
        %v983 = vmax.f32 %v981, %v899
        %v984 = vmax.f32 %v982, %v903
        %v985 = vmax.f32 %v983, %v909
        %v986 = vmax.f32 %v984, %v913
        %v987 = vmax.f32 %v985, %v919
        %v988 = vmax.f32 %v986, %v923
        %v989 = vmax.f32 %v987, %v929
        %v990 = vmax.f32 %v988, %v933
        %v991 = vmax.f32 %v989, %v939
        %v992 = vmax.f32 %v990, %v943
        %v993 = vmax.f32 %v991, %v949
        %v994 = vmax.f32 %v992, %v953
        %v995 = vmax.f32 %v993, %v959
        %v996 = vmax.f32 %v994, %v963
        %v997 = vmax.f32 %v995, %v996
        %v998 = vrot.slane %v997, 4
        %v999 = vmax.f32 %v997, %v998
        %v1000 = vrot.slane %v999, 2
        %v1001 = vmax.f32 %v999, %v1000
        %v1002 = vrot.slane %v1001, 1
        %v1003 = vmax.f32 %v1001, %v1002
        %v1004 = vmax.f32 %v811, %v821
        %v1005 = vmax.f32 %v815, %v825
        %v1006 = vmax.f32 %v1004, %v831
        %v1007 = vmax.f32 %v1005, %v835
        %v1008 = vmax.f32 %v1006, %v841
        %v1009 = vmax.f32 %v1007, %v845
        %v1010 = vmax.f32 %v1008, %v851
        %v1011 = vmax.f32 %v1009, %v855
        %v1012 = vmax.f32 %v1010, %v861
        %v1013 = vmax.f32 %v1011, %v865
        %v1014 = vmax.f32 %v1012, %v871
        %v1015 = vmax.f32 %v1013, %v875
        %v1016 = vmax.f32 %v1014, %v881
        %v1017 = vmax.f32 %v1015, %v885
        %v1018 = vmax.f32 %v1016, %v891
        %v1019 = vmax.f32 %v1017, %v895
        %v1020 = vmax.f32 %v1018, %v901
        %v1021 = vmax.f32 %v1019, %v905
        %v1022 = vmax.f32 %v1020, %v911
        %v1023 = vmax.f32 %v1021, %v915
        %v1024 = vmax.f32 %v1022, %v921
        %v1025 = vmax.f32 %v1023, %v925
        %v1026 = vmax.f32 %v1024, %v931
        %v1027 = vmax.f32 %v1025, %v935
        %v1028 = vmax.f32 %v1026, %v941
        %v1029 = vmax.f32 %v1027, %v945
        %v1030 = vmax.f32 %v1028, %v951
        %v1031 = vmax.f32 %v1029, %v955
        %v1032 = vmax.f32 %v1030, %v961
        %v1033 = vmax.f32 %v1031, %v965
        %v1034 = vmax.f32 %v1032, %v1033
        %v1035 = vrot.slane %v1034, 4
        %v1036 = vmax.f32 %v1034, %v1035
        %v1037 = vrot.slane %v1036, 2
        %v1038 = vmax.f32 %v1036, %v1037
        %v1039 = vrot.slane %v1038, 1
        %v1040 = vmax.f32 %v1038, %v1039
        %v1041 = vmax.f32 %v1003, -1e+30
        %v1042 = vmax.f32 %v1040, -1e+30
        %v1043 = vsub.f32 -1e+30, %v1041
        %v1044 = vsub.f32 -1e+30, %v1042
        %v1045 = vmul.f32 %v1043, 1.442695
        %v1046 = vpow.pop %v1045
        %v1047 = vmul.f32 %v1044, 1.442695
        %v1048 = vpow.pop %v1047
        %v1049 = vsub.f32 %v809, %v1041
        %v1050 = vsub.f32 %v811, %v1042
        %v1051 = vsub.f32 %v813, %v1041
        %v1052 = vsub.f32 %v815, %v1042
        %v1053 = vsub.f32 %v819, %v1041
        %v1054 = vsub.f32 %v821, %v1042
        %v1055 = vsub.f32 %v823, %v1041
        %v1056 = vsub.f32 %v825, %v1042
        %v1057 = vsub.f32 %v829, %v1041
        %v1058 = vsub.f32 %v831, %v1042
        %v1059 = vsub.f32 %v833, %v1041
        %v1060 = vsub.f32 %v835, %v1042
        %v1061 = vsub.f32 %v839, %v1041
        %v1062 = vsub.f32 %v841, %v1042
        %v1063 = vsub.f32 %v843, %v1041
        %v1064 = vsub.f32 %v845, %v1042
        %v1065 = vsub.f32 %v849, %v1041
        %v1066 = vsub.f32 %v851, %v1042
        %v1067 = vsub.f32 %v853, %v1041
        %v1068 = vsub.f32 %v855, %v1042
        %v1069 = vsub.f32 %v859, %v1041
        %v1070 = vsub.f32 %v861, %v1042
        %v1071 = vsub.f32 %v863, %v1041
        %v1072 = vsub.f32 %v865, %v1042
        %v1073 = vsub.f32 %v869, %v1041
        %v1074 = vsub.f32 %v871, %v1042
        %v1075 = vsub.f32 %v873, %v1041
        %v1076 = vsub.f32 %v875, %v1042
        %v1077 = vsub.f32 %v879, %v1041
        %v1078 = vsub.f32 %v881, %v1042
        %v1079 = vsub.f32 %v883, %v1041
        %v1080 = vsub.f32 %v885, %v1042
        %v1081 = vsub.f32 %v889, %v1041
        %v1082 = vsub.f32 %v891, %v1042
        %v1083 = vsub.f32 %v893, %v1041
        %v1084 = vsub.f32 %v895, %v1042
        %v1085 = vsub.f32 %v899, %v1041
        %v1086 = vsub.f32 %v901, %v1042
        %v1087 = vsub.f32 %v903, %v1041
        %v1088 = vsub.f32 %v905, %v1042
        %v1089 = vsub.f32 %v909, %v1041
        %v1090 = vsub.f32 %v911, %v1042
        %v1091 = vsub.f32 %v913, %v1041
        %v1092 = vsub.f32 %v915, %v1042
        %v1093 = vsub.f32 %v919, %v1041
        %v1094 = vsub.f32 %v921, %v1042
        %v1095 = vsub.f32 %v923, %v1041
        %v1096 = vsub.f32 %v925, %v1042
        %v1097 = vsub.f32 %v929, %v1041
        %v1098 = vsub.f32 %v931, %v1042
        %v1099 = vsub.f32 %v933, %v1041
        %v1100 = vsub.f32 %v935, %v1042
        %v1101 = vsub.f32 %v939, %v1041
        %v1102 = vsub.f32 %v941, %v1042
        %v1103 = vsub.f32 %v943, %v1041
        %v1104 = vsub.f32 %v945, %v1042
        %v1105 = vsub.f32 %v949, %v1041
        %v1106 = vsub.f32 %v951, %v1042
        %v1107 = vsub.f32 %v953, %v1041
        %v1108 = vsub.f32 %v955, %v1042
        %v1109 = vsub.f32 %v959, %v1041
        %v1110 = vsub.f32 %v961, %v1042
        %v1111 = vsub.f32 %v963, %v1041
        %v1112 = vsub.f32 %v965, %v1042
        %v1113 = vmul.f32 %v1049, 1.442695
        %v1114 = vpow.pop %v1113
        %v1115 = vmul.f32 %v1050, 1.442695
        %v1116 = vpow.pop %v1115
        %v1117 = vmul.f32 %v1051, 1.442695
        %v1118 = vpow.pop %v1117
        %v1119 = vmul.f32 %v1052, 1.442695
        %v1120 = vpow.pop %v1119
        %v1121 = vmul.f32 %v1053, 1.442695
        %v1122 = vpow.pop %v1121
        %v1123 = vmul.f32 %v1054, 1.442695
        %v1124 = vpow.pop %v1123
        %v1125 = vmul.f32 %v1055, 1.442695
        %v1126 = vpow.pop %v1125
        %v1127 = vmul.f32 %v1056, 1.442695
        %v1128 = vpow.pop %v1127
        %v1129 = vmul.f32 %v1057, 1.442695
        %v1130 = vpow.pop %v1129
        %v1131 = vmul.f32 %v1058, 1.442695
        %v1132 = vpow.pop %v1131
        %v1133 = vmul.f32 %v1059, 1.442695
        %v1134 = vpow.pop %v1133
        %v1135 = vmul.f32 %v1060, 1.442695
        %v1136 = vpow.pop %v1135
        %v1137 = vmul.f32 %v1061, 1.442695
        %v1138 = vpow.pop %v1137
        %v1139 = vmul.f32 %v1062, 1.442695
        %v1140 = vpow.pop %v1139
        %v1141 = vmul.f32 %v1063, 1.442695
        %v1142 = vpow.pop %v1141
        %v1143 = vmul.f32 %v1064, 1.442695
        %v1144 = vpow.pop %v1143
        %v1145 = vmul.f32 %v1065, 1.442695
        %v1146 = vpow.pop %v1145
        %v1147 = vmul.f32 %v1066, 1.442695
        %v1148 = vpow.pop %v1147
        %v1149 = vmul.f32 %v1067, 1.442695
        %v1150 = vpow.pop %v1149
        %v1151 = vmul.f32 %v1068, 1.442695
        %v1152 = vpow.pop %v1151
        %v1153 = vmul.f32 %v1069, 1.442695
        %v1154 = vpow.pop %v1153
        %v1155 = vmul.f32 %v1070, 1.442695
        %v1156 = vpow.pop %v1155
        %v1157 = vmul.f32 %v1071, 1.442695
        %v1158 = vpow.pop %v1157
        %v1159 = vmul.f32 %v1072, 1.442695
        %v1160 = vpow.pop %v1159
        %v1161 = vmul.f32 %v1073, 1.442695
        %v1162 = vpow.pop %v1161
        %v1163 = vmul.f32 %v1074, 1.442695
        %v1164 = vpow.pop %v1163
        %v1165 = vmul.f32 %v1075, 1.442695
        %v1166 = vpow.pop %v1165
        %v1167 = vmul.f32 %v1076, 1.442695
        %v1168 = vpow.pop %v1167
        %v1169 = vmul.f32 %v1077, 1.442695
        %v1170 = vpow.pop %v1169
        %v1171 = vmul.f32 %v1078, 1.442695
        %v1172 = vpow.pop %v1171
        %v1173 = vmul.f32 %v1079, 1.442695
        %v1174 = vpow.pop %v1173
        %v1175 = vmul.f32 %v1080, 1.442695
        %v1176 = vpow.pop %v1175
        %v1177 = vmul.f32 %v1081, 1.442695
        %v1178 = vpow.pop %v1177
        %v1179 = vmul.f32 %v1082, 1.442695
        %v1180 = vpow.pop %v1179
        %v1181 = vmul.f32 %v1083, 1.442695
        %v1182 = vpow.pop %v1181
        %v1183 = vmul.f32 %v1084, 1.442695
        %v1184 = vpow.pop %v1183
        %v1185 = vmul.f32 %v1085, 1.442695
        %v1186 = vpow.pop %v1185
        %v1187 = vmul.f32 %v1086, 1.442695
        %v1188 = vpow.pop %v1187
        %v1189 = vmul.f32 %v1087, 1.442695
        %v1190 = vpow.pop %v1189
        %v1191 = vmul.f32 %v1088, 1.442695
        %v1192 = vpow.pop %v1191
        %v1193 = vmul.f32 %v1089, 1.442695
        %v1194 = vpow.pop %v1193
        %v1195 = vmul.f32 %v1090, 1.442695
        %v1196 = vpow.pop %v1195
        %v1197 = vmul.f32 %v1091, 1.442695
        %v1198 = vpow.pop %v1197
        %v1199 = vmul.f32 %v1092, 1.442695
        %v1200 = vpow.pop %v1199
        %v1201 = vmul.f32 %v1093, 1.442695
        %v1202 = vpow.pop %v1201
        %v1203 = vmul.f32 %v1094, 1.442695
        %v1204 = vpow.pop %v1203
        %v1205 = vmul.f32 %v1095, 1.442695
        %v1206 = vpow.pop %v1205
        %v1207 = vmul.f32 %v1096, 1.442695
        %v1208 = vpow.pop %v1207
        %v1209 = vmul.f32 %v1097, 1.442695
        %v1210 = vpow.pop %v1209
        %v1211 = vmul.f32 %v1098, 1.442695
        %v1212 = vpow.pop %v1211
        %v1213 = vmul.f32 %v1099, 1.442695
        %v1214 = vpow.pop %v1213
        %v1215 = vmul.f32 %v1100, 1.442695
        %v1216 = vpow.pop %v1215
        %v1217 = vmul.f32 %v1101, 1.442695
        %v1218 = vpow.pop %v1217
        %v1219 = vmul.f32 %v1102, 1.442695
        %v1220 = vpow.pop %v1219
        %v1221 = vmul.f32 %v1103, 1.442695
        %v1222 = vpow.pop %v1221
        %v1223 = vmul.f32 %v1104, 1.442695
        %v1224 = vpow.pop %v1223
        %v1225 = vmul.f32 %v1105, 1.442695
        %v1226 = vpow.pop %v1225
        %v1227 = vmul.f32 %v1106, 1.442695
        %v1228 = vpow.pop %v1227
        %v1229 = vmul.f32 %v1107, 1.442695
        %v1230 = vpow.pop %v1229
        %v1231 = vmul.f32 %v1108, 1.442695
        %v1232 = vpow.pop %v1231
        %v1233 = vmul.f32 %v1109, 1.442695
        %v1234 = vpow.pop %v1233
        %v1235 = vmul.f32 %v1110, 1.442695
        %v1236 = vpow.pop %v1235
        %v1237 = vmul.f32 %v1111, 1.442695
        %v1238 = vpow.pop %v1237
        %v1239 = vmul.f32 %v1112, 1.442695
        %v1240 = vpow.pop %v1239
        %v1241 = vmul.f32 %v1046, 0.0
        %v1242 = vmul.f32 %v1048, 0.0
        %v1243 = vadd.f32 %v1114, %v1118
        %v1244 = vadd.f32 %v1243, %v1122
        %v1245 = vadd.f32 %v1244, %v1126
        %v1246 = vadd.f32 %v1245, %v1130
        %v1247 = vadd.f32 %v1246, %v1134
        %v1248 = vadd.f32 %v1247, %v1138
        %v1249 = vadd.f32 %v1248, %v1142
        %v1250 = vadd.f32 %v1249, %v1146
        %v1251 = vadd.f32 %v1250, %v1150
        %v1252 = vadd.f32 %v1251, %v1154
        %v1253 = vadd.f32 %v1252, %v1158
        %v1254 = vadd.f32 %v1253, %v1162
        %v1255 = vadd.f32 %v1254, %v1166
        %v1256 = vadd.f32 %v1255, %v1170
        %v1257 = vadd.f32 %v1256, %v1174
        %v1258 = vadd.f32 %v1257, %v1178
        %v1259 = vadd.f32 %v1258, %v1182
        %v1260 = vadd.f32 %v1259, %v1186
        %v1261 = vadd.f32 %v1260, %v1190
        %v1262 = vadd.f32 %v1261, %v1194
        %v1263 = vadd.f32 %v1262, %v1198
        %v1264 = vadd.f32 %v1263, %v1202
        %v1265 = vadd.f32 %v1264, %v1206
        %v1266 = vadd.f32 %v1265, %v1210
        %v1267 = vadd.f32 %v1266, %v1214
        %v1268 = vadd.f32 %v1267, %v1218
        %v1269 = vadd.f32 %v1268, %v1222
        %v1270 = vadd.f32 %v1269, %v1226
        %v1271 = vadd.f32 %v1270, %v1230
        %v1272 = vadd.f32 %v1271, %v1234
        %v1273 = vadd.f32 %v1272, %v1238
        %v1274 = vrot.slane %v1273, 4
        %v1275 = vadd.f32 %v1273, %v1274
        %v1276 = vrot.slane %v1275, 2
        %v1277 = vadd.f32 %v1275, %v1276
        %v1278 = vrot.slane %v1277, 1
        %v1279 = vadd.f32 %v1277, %v1278
        %v1280 = vadd.f32 %v1116, %v1120
        %v1281 = vadd.f32 %v1280, %v1124
        %v1282 = vadd.f32 %v1281, %v1128
        %v1283 = vadd.f32 %v1282, %v1132
        %v1284 = vadd.f32 %v1283, %v1136
        %v1285 = vadd.f32 %v1284, %v1140
        %v1286 = vadd.f32 %v1285, %v1144
        %v1287 = vadd.f32 %v1286, %v1148
        %v1288 = vadd.f32 %v1287, %v1152
        %v1289 = vadd.f32 %v1288, %v1156
        %v1290 = vadd.f32 %v1289, %v1160
        %v1291 = vadd.f32 %v1290, %v1164
        %v1292 = vadd.f32 %v1291, %v1168
        %v1293 = vadd.f32 %v1292, %v1172
        %v1294 = vadd.f32 %v1293, %v1176
        %v1295 = vadd.f32 %v1294, %v1180
        %v1296 = vadd.f32 %v1295, %v1184
        %v1297 = vadd.f32 %v1296, %v1188
        %v1298 = vadd.f32 %v1297, %v1192
        %v1299 = vadd.f32 %v1298, %v1196
        %v1300 = vadd.f32 %v1299, %v1200
        %v1301 = vadd.f32 %v1300, %v1204
        %v1302 = vadd.f32 %v1301, %v1208
        %v1303 = vadd.f32 %v1302, %v1212
        %v1304 = vadd.f32 %v1303, %v1216
        %v1305 = vadd.f32 %v1304, %v1220
        %v1306 = vadd.f32 %v1305, %v1224
        %v1307 = vadd.f32 %v1306, %v1228
        %v1308 = vadd.f32 %v1307, %v1232
        %v1309 = vadd.f32 %v1308, %v1236
        %v1310 = vadd.f32 %v1309, %v1240
        %v1311 = vrot.slane %v1310, 4
        %v1312 = vadd.f32 %v1310, %v1311
        %v1313 = vrot.slane %v1312, 2
        %v1314 = vadd.f32 %v1312, %v1313
        %v1315 = vrot.slane %v1314, 1
        %v1316 = vadd.f32 %v1314, %v1315
        %v1317 = vadd.f32 %v1241, %v1279
        %v1318 = vadd.f32 %v1242, %v1316
        %v1319 = vpack.c.bf16 %v1118, %v1114
        %v1320 = vpack.c.bf16 %v1120, %v1116
        %v1321 = vpack.c.bf16 %v1126, %v1122
        %v1322 = vpack.c.bf16 %v1128, %v1124
        %v1323 = vpack.c.bf16 %v1134, %v1130
        %v1324 = vpack.c.bf16 %v1136, %v1132
        %v1325 = vpack.c.bf16 %v1142, %v1138
        %v1326 = vpack.c.bf16 %v1144, %v1140
        %v1327 = vpack.c.bf16 %v1150, %v1146
        %v1328 = vpack.c.bf16 %v1152, %v1148
        %v1329 = vpack.c.bf16 %v1158, %v1154
        %v1330 = vpack.c.bf16 %v1160, %v1156
        %v1331 = vpack.c.bf16 %v1166, %v1162
        %v1332 = vpack.c.bf16 %v1168, %v1164
        %v1333 = vpack.c.bf16 %v1174, %v1170
        %v1334 = vpack.c.bf16 %v1176, %v1172
        %v1335 = vpack.c.bf16 %v1182, %v1178
        %v1336 = vpack.c.bf16 %v1184, %v1180
        %v1337 = vpack.c.bf16 %v1190, %v1186
        %v1338 = vpack.c.bf16 %v1192, %v1188
        %v1339 = vpack.c.bf16 %v1198, %v1194
        %v1340 = vpack.c.bf16 %v1200, %v1196
        %v1341 = vpack.c.bf16 %v1206, %v1202
        %v1342 = vpack.c.bf16 %v1208, %v1204
        %v1343 = vpack.c.bf16 %v1214, %v1210
        %v1344 = vpack.c.bf16 %v1216, %v1212
        %v1345 = vpack.c.bf16 %v1222, %v1218
        %v1346 = vpack.c.bf16 %v1224, %v1220
        %v1347 = vpack.c.bf16 %v1230, %v1226
        %v1348 = vpack.c.bf16 %v1232, %v1228
        %v1349 = vpack.c.bf16 %v1238, %v1234
        %v1350 = vpack.c.bf16 %v1240, %v1236
        %v1355 = vunpack.c.l.b16 %v641
        %v1356 = vunpack.c.h.b16 %v641
        %v1357 = vunpack.c.l.b16 %v642
        %v1358 = vunpack.c.h.b16 %v642
        %v1359 = vunpack.c.l.b16 %v643
        %v1360 = vunpack.c.h.b16 %v643
        %v1361 = vunpack.c.l.b16 %v644
        %v1362 = vunpack.c.h.b16 %v644
        %v1363 = vpack.c.b16 %v1357, %v1355
        %v1364 = vpack.c.b16 %v1358, %v1356
        %v1365 = vpack.c.b16 %v1361, %v1359
        %v1366 = vpack.c.b16 %v1362, %v1360
        %1371 = vmatprep.subr.bf16.mxu0 %v1334
        %1372 = vmatpush1.bf16.msra.mxu0 %v1333
        %1373 = vmatprep.subr.bf16.mxu0 %v1332
        %1374 = vmatpush1.bf16.msra.mxu0 %v1331
        %1375 = vmatprep.subr.bf16.mxu0 %v1330
        %1376 = vmatpush1.bf16.msra.mxu0 %v1329
        %1377 = vmatprep.subr.bf16.mxu0 %v1328
        %1378 = vmatpush1.bf16.msra.mxu0 %v1327
        %1379 = vmatprep.subr.bf16.mxu0 %v1326
        %1380 = vmatpush1.bf16.msra.mxu0 %v1325
        %1381 = vmatprep.subr.bf16.mxu0 %v1324
        %1382 = vmatpush1.bf16.msra.mxu0 %v1323
        %1383 = vmatprep.subr.bf16.mxu0 %v1322
        %1384 = vmatpush1.bf16.msra.mxu0 %v1321
        %1385 = vmatprep.subr.bf16.mxu0 %v1320
        %1386 = vmatpush1.bf16.msra.mxu0 %v1319
        %1387 = vmatprep.subr.bf16.mxu0 %v1350
        %1388 = vmatpush2.bf16.msra.mxu0 %v1349
        %1389 = vmatprep.subr.bf16.mxu0 %v1348
        %1390 = vmatpush2.bf16.msra.mxu0 %v1347
        %1391 = vmatprep.subr.bf16.mxu0 %v1346
        %1392 = vmatpush2.bf16.msra.mxu0 %v1345
        %1393 = vmatprep.subr.bf16.mxu0 %v1344
        %1394 = vmatpush2.bf16.msra.mxu0 %v1343
        %1395 = vmatprep.subr.bf16.mxu0 %v1342
        %1396 = vmatpush2.bf16.msra.mxu0 %v1341
        %1397 = vmatprep.subr.bf16.mxu0 %v1340
        %1398 = vmatpush2.bf16.msra.mxu0 %v1339
        %1399 = vmatprep.subr.bf16.mxu0 %v1338
        %1400 = vmatpush2.bf16.msra.mxu0 %v1337
        %1401 = vmatprep.subr.bf16.mxu0 %v1336
        %1402 = vmatpush2.bf16.msra.mxu0 %v1335
        %1403 = vmatprep.mubr.bf16.mxu0 %v1364
        %1404 = vmatmul.mubr.bf16.gmra.mxu0 %v1363
        %v1405 = vpop.f32.mrf.mxu0
        %v1406 = vadd.f32 0.0, %v1405
        %v1407 = vpop.f32.mrf.mxu0
        %v1408 = vadd.f32 0.0, %v1407
        %v1409 = vpop.f32.mrf.mxu0
        %v1410 = vadd.f32 0.0, %v1409
        %v1411 = vpop.f32.mrf.mxu0
        %v1412 = vadd.f32 0.0, %v1411
        %1413 = vmatprep.mubr.bf16.mxu0 %v1366
        %1414 = vmatmul.mubr.bf16.gmra.mxu0 %v1365
        %v1415 = vpop.f32.mrf.mxu0
        %v1416 = vadd.f32 0.0, %v1415
        %v1417 = vpop.f32.mrf.mxu0
        %v1418 = vadd.f32 0.0, %v1417
        %v1419 = vpop.f32.mrf.mxu0
        %v1420 = vadd.f32 0.0, %v1419
        %v1421 = vpop.f32.mrf.mxu0
        %v1422 = vadd.f32 0.0, %v1421
        %1423 = vdwg.mxu0
        %v1424 = vadd.f32 %v1241, %v1406
        %v1425 = vadd.f32 %v1242, %v1408
        %v1426 = vadd.f32 %v1241, %v1410
        %v1427 = vadd.f32 %v1242, %v1412
        %v1428 = vadd.f32 %v1241, %v1416
        %v1429 = vadd.f32 %v1242, %v1418
        %v1430 = vadd.f32 %v1241, %v1420
        %v1431 = vadd.f32 %v1242, %v1422
        %v1432 = vrcp.pop %v1317
        %v1433 = vmul.f32 %v1424, %v1432
        %v1434 = vrcp.pop %v1318
        %v1435 = vmul.f32 %v1425, %v1434
        %v1436 = vmul.f32 %v1426, %v1432
        %v1437 = vmul.f32 %v1427, %v1434
        %v1438 = vmul.f32 %v1428, %v1432
        %v1439 = vmul.f32 %v1429, %v1434
        %v1440 = vmul.f32 %v1430, %v1432
        %v1441 = vmul.f32 %v1431, %v1434
        %1442 = vst [vmem:[%s310] sm:$0xff] %v1433
        %1443 = vst [vmem:[%s310 + $0x8] sm:$0xff] %v1435
        %1444 = vst [vmem:[%s310 + $0x10] sm:$0xff] %v1436
        %1445 = vst [vmem:[%s310 + $0x18] sm:$0xff] %v1437
        %1446 = vst [vmem:[%s310 + $0x20] sm:$0xff] %v1438
        %1447 = vst [vmem:[%s310 + $0x28] sm:$0xff] %v1439
        %1448 = vst [vmem:[%s310 + $0x30] sm:$0xff] %v1440
        %1449 = vst [vmem:[%s310 + $0x38] sm:$0xff] %v1441
        %s1450 = sand.u32 %s144, 1
        %s1451 = scalar_lea.sflag [#allocation6], %s1450
        %s1452 = sand.u32 %s144, 1
        %s1453 = smul.addr %s1452, 64
        %s1454 = scalar_lea.vmem [#allocation10], %s1453
        // Predicated region
        $region49: #{tpu_custom_call.1} parent=31 // pred_check
          %p1455 = pneg %p154
        $region50: #{tpu_custom_call.1} parent=31 // pred_check_branch
          %1457 = sbr.rel (%p1455) target = $region52
        $region51: #{tpu_custom_call.1} parent=31 // pred_region
          %s1458 = smul.u32 2, %s30
          %s1460 = ssub.s32 1024, 1024
          %1461 = vsyncadd %s1451, %s1460
          %s1462 = smul.addr %s29, 8
          %s1463 = sadd.s32 %s1458, %s1462
          %s1464 = smul.addr %s28, 16
          %s1465 = sadd.s32 %s1463, %s1464
          %s1466 = smul.addr %s1465, 128
          %s1467 = scalar_lea.hbm %s3, %s1466
          %s1468 = sshll.u32 %s1454, 4
          %s1469 = int_to_ptr.vmem [resolvable:$true] %s1468
          %1474 = dma.vmem_to_hbm [thread:$0]  %s1469, 1024, %s1467, %s1451, 256, 256, 16
        $region52: #{tpu_custom_call.1} parent=31 // pred_fallthru
          _
      $region32: #{tpu_custom_call.1} parent=5 // pred_fallthru
        _
      %p1475 = scmp.le.s32.totalorder 2, %s18
      // Predicated region
      $region53: #{tpu_custom_call.1} parent=5 // pred_check
        %p1476 = pneg %p1475
      $region54: #{tpu_custom_call.1} parent=5 // pred_check_branch
        %1478 = sbr.rel (%p1476) target = $region56
      $region55: #{tpu_custom_call.1} parent=5 // pred_region
        %s1479 = ssub.s32 %s18, 2
        // Predicated region
        $region57: #{tpu_custom_call.1} parent=55 // pred_check
          %p1480 = pneg %p160
        $region58: #{tpu_custom_call.1} parent=55 // pred_check_branch
          %1482 = sbr.rel (%p1480) target = $region60
        $region59: #{tpu_custom_call.1} parent=55 // pred_region
          %s1483 = sand.u32 %s145, 1
          %s1484 = scalar_lea.sflag [#allocation6], %s1483
          %s1485 = sand.u32 %s145, 1
          %s1486 = smul.addr %s1485, 64
          %s1487 = scalar_lea.vmem [#allocation10], %s1486
          %1488 = dma.done %s1484, 1024
        $region60: #{tpu_custom_call.1} parent=55 // pred_fallthru
          _
      $region56: #{tpu_custom_call.1} parent=5 // pred_fallthru
        _
    $region6: #{tpu_custom_call.1} parent=1 // loop_footer
      %s22 = sadd.s32 1, %s18
    $region7: #{tpu_custom_call.1} parent=1 // loop_footer_branch
      %17 = sbr.rel target = $region3
    $region8: #{tpu_custom_call.1} parent=1 // loop_exit
      _
    %1489 = vsyncpa [#allocation5], 1
    %s1490 = scalar_lea.sflag [#allocation5], 1
    %1491 = vsyncpa %s1490, 1
    %1492 = vsyncpa [#allocation8], 1
    %s1493 = scalar_lea.sflag [#allocation8], 1
    %1494 = vsyncpa %s1493, 1
    %1495 = vsyncpa [#allocation6], 1
    %s1496 = scalar_lea.sflag [#allocation6], 1
    %1497 = vsyncpa %s1496, 1

</llo_original>
